<compile_context>
chip_gen: v6e
topology: v6e:2x2x1
jax: 0.10.0
libtpu: 0.0.40
codegen_flags: <defaults>
</compile_context>

<pallas_src>
import jax
import jax.numpy as jnp
from jax.experimental import pallas as pl
from jax.experimental.pallas import tpu as pltpu

# Hyperparameters (module defaults, small shapes)
INPUT_DIM = 16
OUTPUT_DIM = 1
D_MODEL = 64
NHEAD = 4            # documented only; heads collapse for seq_len == 1
NUM_LAYERS = 4
DIM_FF = 128
EPS = 1e-5           # nn.LayerNorm default eps
BATCH = 8

# Row layout of the per-layer f32 vector slab `vecs` (shape (NUM_LAYERS+1, 8, D_MODEL)):
#   layer l rows: 0=b_att, 1=ln1_gamma, 2=ln1_beta, 3=b2, 4=ln2_gamma, 5=ln2_beta
#   layer NUM_LAYERS (globals): 0=emb_bias, 1=fc_out weight row, 2=fc_out bias (broadcast)


def _layernorm(h, g, b):
    mu = jnp.mean(h, axis=-1, keepdims=True)
    var = jnp.mean((h - mu) ** 2, axis=-1, keepdims=True)   # biased var, as in torch
    return (h - mu) * jax.lax.rsqrt(var + EPS) * g + b


def transformer_kernel(x_ref, emb_w_ref, w_att_ref, w1_ref, w2_ref, b1_ref, vecs_ref,
                       o_ref):
    # feature_embedding: bf16 matmul, f32 accumulation, f32 bias add
    h = jnp.dot(x_ref[...], emb_w_ref[...],
                preferred_element_type=jnp.float32) + vecs_ref[NUM_LAYERS, 0:1, :]

    # TransformerEncoder: NUM_LAYERS post-norm layers with ReLU FFN (unrolled)
    for l in range(NUM_LAYERS):
        b_att = vecs_ref[l, 0:1, :]
        ln1g = vecs_ref[l, 1:2, :]
        ln1b = vecs_ref[l, 2:3, :]
        b2 = vecs_ref[l, 3:4, :]
        ln2g = vecs_ref[l, 4:5, :]
        ln2b = vecs_ref[l, 5:6, :]

        # fused self-attention (seq_len==1): attn = h @ (Wv Wo) + (bv Wo + bo)
        attn = jnp.dot(h.astype(jnp.bfloat16), w_att_ref[l],
                       preferred_element_type=jnp.float32) + b_att
        h = _layernorm(h + attn, ln1g, ln1b)          # norm1(x + sa_block(x))

        ff = jnp.dot(h.astype(jnp.bfloat16), w1_ref[l],
                     preferred_element_type=jnp.float32) + b1_ref[l]
        ff = jnp.maximum(ff, 0.0)                     # ReLU
        ff = jnp.dot(ff.astype(jnp.bfloat16), w2_ref[l],
                     preferred_element_type=jnp.float32) + b2
        h = _layernorm(h + ff, ln2g, ln2b)            # norm2(x + ff_block(x))

    # fc_out (OUTPUT_DIM == 1) as a lane reduction instead of an N=1 matmul, + sigmoid
    fcw_row = vecs_ref[NUM_LAYERS, 1:2, :]            # (1, D_MODEL)
    fcb = vecs_ref[NUM_LAYERS, 2:3, 0:1]              # (1, 1)
    logits = jnp.sum(h * fcw_row, axis=-1, keepdims=True) + fcb
    o_ref[...] = jax.nn.sigmoid(logits)


def transformer_forward(x, packed):
    args = (x.astype(jnp.bfloat16), packed["emb_w"], packed["w_att"],
            packed["w1"], packed["w2"], packed["b1"], packed["vecs"])
    vmem_spec = pl.BlockSpec(memory_space=pltpu.MemorySpace.VMEM)
    out = pl.pallas_call(
        transformer_kernel,
        out_shape=jax.ShapeDtypeStruct((x.shape[0], OUTPUT_DIM), jnp.float32),
        in_specs=[vmem_spec] * len(args),
        out_specs=vmem_spec,
    )(*args)
    return jnp.squeeze(out)   # mirrors the final x.squeeze() in the torch module


# ----------------------------------------------------------------------------
# Parameter construction / packing
# ----------------------------------------------------------------------------

def init_params(key):
    keys = jax.random.split(key, 12)
    s = 0.05
    p = {}
    p["emb_w"] = jax.random.normal(keys[0], (INPUT_DIM, D_MODEL), jnp.float32) * s
    p["emb_b"] = jax.random.normal(keys[1], (1, D_MODEL), jnp.float32) * s
    p["wv"] = jax.random.normal(keys[2], (NUM_LAYERS, D_MODEL, D_MODEL), jnp.float32) * s
    p["bv"] = jax.random.normal(keys[3], (NUM_LAYERS, 1, D_MODEL), jnp.float32) * s
    p["wo"] = jax.random.normal(keys[4], (NUM_LAYERS, D_MODEL, D_MODEL), jnp.float32) * s
    p["bo"] = jax.random.normal(keys[5], (NUM_LAYERS, 1, D_MODEL), jnp.float32) * s
    p["ln1g"] = jnp.ones((NUM_LAYERS, 1, D_MODEL), jnp.float32)
    p["ln1b"] = jnp.zeros((NUM_LAYERS, 1, D_MODEL), jnp.float32)
    p["w1"] = jax.random.normal(keys[6], (NUM_LAYERS, D_MODEL, DIM_FF), jnp.float32) * s
    p["b1"] = jax.random.normal(keys[7], (NUM_LAYERS, 1, DIM_FF), jnp.float32) * s
    p["w2"] = jax.random.normal(keys[8], (NUM_LAYERS, DIM_FF, D_MODEL), jnp.float32) * s
    p["b2"] = jax.random.normal(keys[9], (NUM_LAYERS, 1, D_MODEL), jnp.float32) * s
    p["ln2g"] = jnp.ones((NUM_LAYERS, 1, D_MODEL), jnp.float32)
    p["ln2b"] = jnp.zeros((NUM_LAYERS, 1, D_MODEL), jnp.float32)
    p["fcw"] = jax.random.normal(keys[10], (D_MODEL, OUTPUT_DIM), jnp.float32) * s
    p["fcb"] = jax.random.normal(keys[11], (1, OUTPUT_DIM), jnp.float32) * s
    return p


def pack_params(p):
    # Offline fusion of the (seq_len==1) attention:  attn = h @ (Wv Wo) + (bv Wo + bo)
    w_att = jnp.einsum("lij,ljk->lik", p["wv"], p["wo"])                 # (L, D, D)
    b_att = jnp.einsum("lij,ljk->lik", p["bv"], p["wo"]) + p["bo"]       # (L, 1, D)

    vecs = jnp.zeros((NUM_LAYERS + 1, 8, D_MODEL), jnp.float32)
    vecs = vecs.at[:NUM_LAYERS, 0].set(b_att[:, 0])
    vecs = vecs.at[:NUM_LAYERS, 1].set(p["ln1g"][:, 0])
    vecs = vecs.at[:NUM_LAYERS, 2].set(p["ln1b"][:, 0])
    vecs = vecs.at[:NUM_LAYERS, 3].set(p["b2"][:, 0])
    vecs = vecs.at[:NUM_LAYERS, 4].set(p["ln2g"][:, 0])
    vecs = vecs.at[:NUM_LAYERS, 5].set(p["ln2b"][:, 0])
    vecs = vecs.at[NUM_LAYERS, 0].set(p["emb_b"][0])
    vecs = vecs.at[NUM_LAYERS, 1].set(p["fcw"][:, 0])
    vecs = vecs.at[NUM_LAYERS, 2].set(jnp.full((D_MODEL,), p["fcb"][0, 0]))

    return {
        "emb_w": p["emb_w"].astype(jnp.bfloat16),
        "w_att": w_att.astype(jnp.bfloat16),
        "w1": p["w1"].astype(jnp.bfloat16),
        "w2": p["w2"].astype(jnp.bfloat16),
        "b1": p["b1"],            # (L, 1, DIM_FF) f32
        "vecs": vecs,             # (L+1, 8, D) f32
    }


# ----------------------------------------------------------------------------
# References
# ----------------------------------------------------------------------------

def reference_forward_f32(x, p):
    # Pure-JAX f32 reference mirroring the PyTorch forward (eval mode, no fusion).
    h = x @ p["emb_w"] + p["emb_b"]
    for l in range(NUM_LAYERS):
        v = h @ p["wv"][l] + p["bv"][l]
        attn = v @ p["wo"][l] + p["bo"][l]
        h = _layernorm(h + attn, p["ln1g"][l], p["ln1b"][l])
        ff = jnp.maximum(h @ p["w1"][l] + p["b1"][l], 0.0) @ p["w2"][l] + p["b2"][l]
        h = _layernorm(h + ff, p["ln2g"][l], p["ln2b"][l])
    return jnp.squeeze(jax.nn.sigmoid(h @ p["fcw"] + p["fcb"]))


def reference_forward_matched(x, packed):
    # Pure-JAX reference with the SAME precision choices as the kernel
    # (bf16 matmul operands, f32 accumulation, fused attention weights).
    vecs = packed["vecs"]
    h = jnp.dot(x.astype(jnp.bfloat16), packed["emb_w"],
                preferred_element_type=jnp.float32) + vecs[NUM_LAYERS, 0:1]
    for l in range(NUM_LAYERS):
        attn = jnp.dot(h.astype(jnp.bfloat16), packed["w_att"][l],
                       preferred_element_type=jnp.float32) + vecs[l, 0:1]
        h = _layernorm(h + attn, vecs[l, 1:2], vecs[l, 2:3])
        ff = jnp.dot(h.astype(jnp.bfloat16), packed["w1"][l],
                     preferred_element_type=jnp.float32) + packed["b1"][l]
        ff = jnp.maximum(ff, 0.0)
        ff = jnp.dot(ff.astype(jnp.bfloat16), packed["w2"][l],
                     preferred_element_type=jnp.float32) + vecs[l, 3:4]
        h = _layernorm(h + ff, vecs[l, 4:5], vecs[l, 5:6])
    logits = jnp.sum(h * vecs[NUM_LAYERS, 1:2], axis=-1, keepdims=True) \
        + vecs[NUM_LAYERS, 2, 0]
    return jnp.squeeze(jax.nn.sigmoid(logits))


if __name__ == "__main__":
    key = jax.random.PRNGKey(0)
    kx, kp = jax.random.split(key)
    x = jax.random.normal(kx, (BATCH, INPUT_DIM), jnp.float32)
    params = init_params(kp)
    packed = pack_params(params)

    out = transformer_forward(x, packed)
    out = jax.block_until_ready(out)
    assert out.shape == (BATCH,), out.shape

    # Strict check vs. a reference that uses the same (bf16-operand) precision.
    ref_matched = reference_forward_matched(x, packed)
    assert jnp.allclose(out, ref_matched, atol=1e-4, rtol=1e-4), (out, ref_matched)

    # Loose sanity check vs. the plain f32, non-fused reference (bf16 weight rounding).
    ref_f32 = reference_forward_f32(x, params)
    assert jnp.allclose(out, ref_f32, atol=2e-2, rtol=2e-2), (out, ref_f32)

    # TODO(synk): dropout(p=0.1) implemented with eval-mode (identity) semantics only.
    print("KERNEL_OK")
</pallas_src>

<mosaic_0001>
module attributes {stable_mosaic.version = 11 : i64} {
  func.func @transformer_kernel(%arg0: memref<8x16xbf16, #tpu.memory_space<vmem>>, %arg1: memref<16x64xbf16, #tpu.memory_space<vmem>>, %arg2: memref<4x64x64xbf16, #tpu.memory_space<vmem>>, %arg3: memref<4x64x128xbf16, #tpu.memory_space<vmem>>, %arg4: memref<4x128x64xbf16, #tpu.memory_space<vmem>>, %arg5: memref<4x1x128xf32, #tpu.memory_space<vmem>>, %arg6: memref<5x8x64xf32, #tpu.memory_space<vmem>>, %arg7: memref<8x1xf32, #tpu.memory_space<vmem>>) attributes {dimension_semantics = [], scalar_prefetch = 0 : i64, scratch_operands = 0 : i64, tpu.core_type = #tpu.core_type<tc>} {
    %c0 = arith.constant 0 : index
    %c0_0 = arith.constant 0 : index
    %0 = vector.load %arg0[%c0, %c0_0] : memref<8x16xbf16, #tpu.memory_space<vmem>>, vector<8x16xbf16>
    %c0_1 = arith.constant 0 : index
    %c0_2 = arith.constant 0 : index
    %1 = vector.load %arg1[%c0_1, %c0_2] : memref<16x64xbf16, #tpu.memory_space<vmem>>, vector<16x64xbf16>
    %cst = arith.constant dense<0.000000e+00> : vector<8x64xf32>
    %2 = tpu.matmul %0, %1, %cst {dimension_numbers = #tpu.dot_dimension_numbers<[1], [0], [0], [1], [0, 0, 1, 1], [], []>} : vector<8x16xbf16>, vector<16x64xbf16>, vector<8x64xf32> -> vector<8x64xf32>
    %c4 = arith.constant 4 : index
    %c0_3 = arith.constant 0 : index
    %c0_4 = arith.constant 0 : index
    %3 = vector.load %arg6[%c4, %c0_3, %c0_4] : memref<5x8x64xf32, #tpu.memory_space<vmem>>, vector<1x1x64xf32>
    %4 = vector.shape_cast %3 : vector<1x1x64xf32> to vector<1x64xf32>
    %5 = vector.broadcast %4 : vector<1x64xf32> to vector<8x64xf32>
    %6 = arith.addf %2, %5 : vector<8x64xf32>
    %c0_5 = arith.constant 0 : index
    %c0_6 = arith.constant 0 : index
    %c0_7 = arith.constant 0 : index
    %7 = vector.load %arg6[%c0_5, %c0_6, %c0_7] : memref<5x8x64xf32, #tpu.memory_space<vmem>>, vector<1x1x64xf32>
    %8 = vector.shape_cast %7 : vector<1x1x64xf32> to vector<1x64xf32>
    %c0_8 = arith.constant 0 : index
    %c1 = arith.constant 1 : index
    %c0_9 = arith.constant 0 : index
    %9 = vector.load %arg6[%c0_8, %c1, %c0_9] : memref<5x8x64xf32, #tpu.memory_space<vmem>>, vector<1x1x64xf32>
    %10 = vector.shape_cast %9 : vector<1x1x64xf32> to vector<1x64xf32>
    %c0_10 = arith.constant 0 : index
    %c2 = arith.constant 2 : index
    %c0_11 = arith.constant 0 : index
    %11 = vector.load %arg6[%c0_10, %c2, %c0_11] : memref<5x8x64xf32, #tpu.memory_space<vmem>>, vector<1x1x64xf32>
    %12 = vector.shape_cast %11 : vector<1x1x64xf32> to vector<1x64xf32>
    %c0_12 = arith.constant 0 : index
    %c3 = arith.constant 3 : index
    %c0_13 = arith.constant 0 : index
    %13 = vector.load %arg6[%c0_12, %c3, %c0_13] : memref<5x8x64xf32, #tpu.memory_space<vmem>>, vector<1x1x64xf32>
    %14 = vector.shape_cast %13 : vector<1x1x64xf32> to vector<1x64xf32>
    %c0_14 = arith.constant 0 : index
    %c4_15 = arith.constant 4 : index
    %c0_16 = arith.constant 0 : index
    %15 = vector.load %arg6[%c0_14, %c4_15, %c0_16] : memref<5x8x64xf32, #tpu.memory_space<vmem>>, vector<1x1x64xf32>
    %16 = vector.shape_cast %15 : vector<1x1x64xf32> to vector<1x64xf32>
    %c0_17 = arith.constant 0 : index
    %c5 = arith.constant 5 : index
    %c0_18 = arith.constant 0 : index
    %17 = vector.load %arg6[%c0_17, %c5, %c0_18] : memref<5x8x64xf32, #tpu.memory_space<vmem>>, vector<1x1x64xf32>
    %18 = vector.shape_cast %17 : vector<1x1x64xf32> to vector<1x64xf32>
    %19 = arith.truncf %6 : vector<8x64xf32> to vector<8x64xbf16>
    %c0_19 = arith.constant 0 : index
    %c0_20 = arith.constant 0 : index
    %c0_21 = arith.constant 0 : index
    %20 = vector.load %arg2[%c0_19, %c0_20, %c0_21] : memref<4x64x64xbf16, #tpu.memory_space<vmem>>, vector<1x64x64xbf16>
    %21 = vector.shape_cast %20 : vector<1x64x64xbf16> to vector<64x64xbf16>
    %cst_22 = arith.constant dense<0.000000e+00> : vector<8x64xf32>
    %22 = tpu.matmul %19, %21, %cst_22 {dimension_numbers = #tpu.dot_dimension_numbers<[1], [0], [0], [1], [0, 0, 1, 1], [], []>} : vector<8x64xbf16>, vector<64x64xbf16>, vector<8x64xf32> -> vector<8x64xf32>
    %23 = vector.broadcast %8 : vector<1x64xf32> to vector<8x64xf32>
    %24 = arith.addf %22, %23 : vector<8x64xf32>
    %25 = arith.addf %6, %24 : vector<8x64xf32>
    %cst_23 = arith.constant dense<0.000000e+00> : vector<8xf32>
    %26 = vector.multi_reduction <add>, %25, %cst_23 [1] : vector<8x64xf32> to vector<8xf32>
    %27 = vector.shape_cast %26 : vector<8xf32> to vector<8x1xf32>
    %cst_24 = arith.constant 6.400000e+01 : f32
    %28 = vector.broadcast %cst_24 : f32 to vector<8x1xf32>
    %29 = arith.divf %27, %28 : vector<8x1xf32>
    %30 = vector.broadcast %29 : vector<8x1xf32> to vector<8x64xf32>
    %31 = arith.subf %25, %30 : vector<8x64xf32>
    %32 = arith.mulf %31, %31 : vector<8x64xf32>
    %cst_25 = arith.constant dense<0.000000e+00> : vector<8xf32>
    %33 = vector.multi_reduction <add>, %32, %cst_25 [1] : vector<8x64xf32> to vector<8xf32>
    %34 = vector.shape_cast %33 : vector<8xf32> to vector<8x1xf32>
    %cst_26 = arith.constant 6.400000e+01 : f32
    %35 = vector.broadcast %cst_26 : f32 to vector<8x1xf32>
    %36 = arith.divf %34, %35 : vector<8x1xf32>
    %37 = vector.broadcast %29 : vector<8x1xf32> to vector<8x64xf32>
    %38 = arith.subf %25, %37 : vector<8x64xf32>
    %cst_27 = arith.constant 9.99999974E-6 : f32
    %39 = vector.broadcast %cst_27 : f32 to vector<8x1xf32>
    %40 = arith.addf %36, %39 : vector<8x1xf32>
    %41 = math.rsqrt %40 : vector<8x1xf32>
    %42 = vector.broadcast %41 : vector<8x1xf32> to vector<8x64xf32>
    %43 = arith.mulf %38, %42 : vector<8x64xf32>
    %44 = vector.broadcast %10 : vector<1x64xf32> to vector<8x64xf32>
    %45 = arith.mulf %43, %44 : vector<8x64xf32>
    %46 = vector.broadcast %12 : vector<1x64xf32> to vector<8x64xf32>
    %47 = arith.addf %45, %46 : vector<8x64xf32>
    %48 = arith.truncf %47 : vector<8x64xf32> to vector<8x64xbf16>
    %c0_28 = arith.constant 0 : index
    %c0_29 = arith.constant 0 : index
    %c0_30 = arith.constant 0 : index
    %49 = vector.load %arg3[%c0_28, %c0_29, %c0_30] : memref<4x64x128xbf16, #tpu.memory_space<vmem>>, vector<1x64x128xbf16>
    %50 = vector.shape_cast %49 : vector<1x64x128xbf16> to vector<64x128xbf16>
    %cst_31 = arith.constant dense<0.000000e+00> : vector<8x128xf32>
    %51 = tpu.matmul %48, %50, %cst_31 {dimension_numbers = #tpu.dot_dimension_numbers<[1], [0], [0], [1], [0, 0, 1, 1], [], []>} : vector<8x64xbf16>, vector<64x128xbf16>, vector<8x128xf32> -> vector<8x128xf32>
    %c0_32 = arith.constant 0 : index
    %c0_33 = arith.constant 0 : index
    %c0_34 = arith.constant 0 : index
    %52 = vector.load %arg5[%c0_32, %c0_33, %c0_34] : memref<4x1x128xf32, #tpu.memory_space<vmem>>, vector<1x1x128xf32>
    %53 = vector.shape_cast %52 : vector<1x1x128xf32> to vector<1x128xf32>
    %54 = vector.broadcast %53 : vector<1x128xf32> to vector<8x128xf32>
    %55 = arith.addf %51, %54 : vector<8x128xf32>
    %cst_35 = arith.constant 0.000000e+00 : f32
    %56 = vector.broadcast %cst_35 : f32 to vector<8x128xf32>
    %57 = arith.maximumf %55, %56 : vector<8x128xf32>
    %58 = arith.truncf %57 : vector<8x128xf32> to vector<8x128xbf16>
    %c0_36 = arith.constant 0 : index
    %c0_37 = arith.constant 0 : index
    %c0_38 = arith.constant 0 : index
    %59 = vector.load %arg4[%c0_36, %c0_37, %c0_38] : memref<4x128x64xbf16, #tpu.memory_space<vmem>>, vector<1x128x64xbf16>
    %60 = vector.shape_cast %59 : vector<1x128x64xbf16> to vector<128x64xbf16>
    %cst_39 = arith.constant dense<0.000000e+00> : vector<8x64xf32>
    %61 = tpu.matmul %58, %60, %cst_39 {dimension_numbers = #tpu.dot_dimension_numbers<[1], [0], [0], [1], [0, 0, 1, 1], [], []>} : vector<8x128xbf16>, vector<128x64xbf16>, vector<8x64xf32> -> vector<8x64xf32>
    %62 = vector.broadcast %14 : vector<1x64xf32> to vector<8x64xf32>
    %63 = arith.addf %61, %62 : vector<8x64xf32>
    %64 = arith.addf %47, %63 : vector<8x64xf32>
    %cst_40 = arith.constant dense<0.000000e+00> : vector<8xf32>
    %65 = vector.multi_reduction <add>, %64, %cst_40 [1] : vector<8x64xf32> to vector<8xf32>
    %66 = vector.shape_cast %65 : vector<8xf32> to vector<8x1xf32>
    %cst_41 = arith.constant 6.400000e+01 : f32
    %67 = vector.broadcast %cst_41 : f32 to vector<8x1xf32>
    %68 = arith.divf %66, %67 : vector<8x1xf32>
    %69 = vector.broadcast %68 : vector<8x1xf32> to vector<8x64xf32>
    %70 = arith.subf %64, %69 : vector<8x64xf32>
    %71 = arith.mulf %70, %70 : vector<8x64xf32>
    %cst_42 = arith.constant dense<0.000000e+00> : vector<8xf32>
    %72 = vector.multi_reduction <add>, %71, %cst_42 [1] : vector<8x64xf32> to vector<8xf32>
    %73 = vector.shape_cast %72 : vector<8xf32> to vector<8x1xf32>
    %cst_43 = arith.constant 6.400000e+01 : f32
    %74 = vector.broadcast %cst_43 : f32 to vector<8x1xf32>
    %75 = arith.divf %73, %74 : vector<8x1xf32>
    %76 = vector.broadcast %68 : vector<8x1xf32> to vector<8x64xf32>
    %77 = arith.subf %64, %76 : vector<8x64xf32>
    %cst_44 = arith.constant 9.99999974E-6 : f32
    %78 = vector.broadcast %cst_44 : f32 to vector<8x1xf32>
    %79 = arith.addf %75, %78 : vector<8x1xf32>
    %80 = math.rsqrt %79 : vector<8x1xf32>
    %81 = vector.broadcast %80 : vector<8x1xf32> to vector<8x64xf32>
    %82 = arith.mulf %77, %81 : vector<8x64xf32>
    %83 = vector.broadcast %16 : vector<1x64xf32> to vector<8x64xf32>
    %84 = arith.mulf %82, %83 : vector<8x64xf32>
    %85 = vector.broadcast %18 : vector<1x64xf32> to vector<8x64xf32>
    %86 = arith.addf %84, %85 : vector<8x64xf32>
    %c1_45 = arith.constant 1 : index
    %c0_46 = arith.constant 0 : index
    %c0_47 = arith.constant 0 : index
    %87 = vector.load %arg6[%c1_45, %c0_46, %c0_47] : memref<5x8x64xf32, #tpu.memory_space<vmem>>, vector<1x1x64xf32>
    %88 = vector.shape_cast %87 : vector<1x1x64xf32> to vector<1x64xf32>
    %c1_48 = arith.constant 1 : index
    %c1_49 = arith.constant 1 : index
    %c0_50 = arith.constant 0 : index
    %89 = vector.load %arg6[%c1_48, %c1_49, %c0_50] : memref<5x8x64xf32, #tpu.memory_space<vmem>>, vector<1x1x64xf32>
    %90 = vector.shape_cast %89 : vector<1x1x64xf32> to vector<1x64xf32>
    %c1_51 = arith.constant 1 : index
    %c2_52 = arith.constant 2 : index
    %c0_53 = arith.constant 0 : index
    %91 = vector.load %arg6[%c1_51, %c2_52, %c0_53] : memref<5x8x64xf32, #tpu.memory_space<vmem>>, vector<1x1x64xf32>
    %92 = vector.shape_cast %91 : vector<1x1x64xf32> to vector<1x64xf32>
    %c1_54 = arith.constant 1 : index
    %c3_55 = arith.constant 3 : index
    %c0_56 = arith.constant 0 : index
    %93 = vector.load %arg6[%c1_54, %c3_55, %c0_56] : memref<5x8x64xf32, #tpu.memory_space<vmem>>, vector<1x1x64xf32>
    %94 = vector.shape_cast %93 : vector<1x1x64xf32> to vector<1x64xf32>
    %c1_57 = arith.constant 1 : index
    %c4_58 = arith.constant 4 : index
    %c0_59 = arith.constant 0 : index
    %95 = vector.load %arg6[%c1_57, %c4_58, %c0_59] : memref<5x8x64xf32, #tpu.memory_space<vmem>>, vector<1x1x64xf32>
    %96 = vector.shape_cast %95 : vector<1x1x64xf32> to vector<1x64xf32>
    %c1_60 = arith.constant 1 : index
    %c5_61 = arith.constant 5 : index
    %c0_62 = arith.constant 0 : index
    %97 = vector.load %arg6[%c1_60, %c5_61, %c0_62] : memref<5x8x64xf32, #tpu.memory_space<vmem>>, vector<1x1x64xf32>
    %98 = vector.shape_cast %97 : vector<1x1x64xf32> to vector<1x64xf32>
    %99 = arith.truncf %86 : vector<8x64xf32> to vector<8x64xbf16>
    %c1_63 = arith.constant 1 : index
    %c0_64 = arith.constant 0 : index
    %c0_65 = arith.constant 0 : index
    %100 = vector.load %arg2[%c1_63, %c0_64, %c0_65] : memref<4x64x64xbf16, #tpu.memory_space<vmem>>, vector<1x64x64xbf16>
    %101 = vector.shape_cast %100 : vector<1x64x64xbf16> to vector<64x64xbf16>
    %cst_66 = arith.constant dense<0.000000e+00> : vector<8x64xf32>
    %102 = tpu.matmul %99, %101, %cst_66 {dimension_numbers = #tpu.dot_dimension_numbers<[1], [0], [0], [1], [0, 0, 1, 1], [], []>} : vector<8x64xbf16>, vector<64x64xbf16>, vector<8x64xf32> -> vector<8x64xf32>
    %103 = vector.broadcast %88 : vector<1x64xf32> to vector<8x64xf32>
    %104 = arith.addf %102, %103 : vector<8x64xf32>
    %105 = arith.addf %86, %104 : vector<8x64xf32>
    %cst_67 = arith.constant dense<0.000000e+00> : vector<8xf32>
    %106 = vector.multi_reduction <add>, %105, %cst_67 [1] : vector<8x64xf32> to vector<8xf32>
    %107 = vector.shape_cast %106 : vector<8xf32> to vector<8x1xf32>
    %cst_68 = arith.constant 6.400000e+01 : f32
    %108 = vector.broadcast %cst_68 : f32 to vector<8x1xf32>
    %109 = arith.divf %107, %108 : vector<8x1xf32>
    %110 = vector.broadcast %109 : vector<8x1xf32> to vector<8x64xf32>
    %111 = arith.subf %105, %110 : vector<8x64xf32>
    %112 = arith.mulf %111, %111 : vector<8x64xf32>
    %cst_69 = arith.constant dense<0.000000e+00> : vector<8xf32>
    %113 = vector.multi_reduction <add>, %112, %cst_69 [1] : vector<8x64xf32> to vector<8xf32>
    %114 = vector.shape_cast %113 : vector<8xf32> to vector<8x1xf32>
    %cst_70 = arith.constant 6.400000e+01 : f32
    %115 = vector.broadcast %cst_70 : f32 to vector<8x1xf32>
    %116 = arith.divf %114, %115 : vector<8x1xf32>
    %117 = vector.broadcast %109 : vector<8x1xf32> to vector<8x64xf32>
    %118 = arith.subf %105, %117 : vector<8x64xf32>
    %cst_71 = arith.constant 9.99999974E-6 : f32
    %119 = vector.broadcast %cst_71 : f32 to vector<8x1xf32>
    %120 = arith.addf %116, %119 : vector<8x1xf32>
    %121 = math.rsqrt %120 : vector<8x1xf32>
    %122 = vector.broadcast %121 : vector<8x1xf32> to vector<8x64xf32>
    %123 = arith.mulf %118, %122 : vector<8x64xf32>
    %124 = vector.broadcast %90 : vector<1x64xf32> to vector<8x64xf32>
    %125 = arith.mulf %123, %124 : vector<8x64xf32>
    %126 = vector.broadcast %92 : vector<1x64xf32> to vector<8x64xf32>
    %127 = arith.addf %125, %126 : vector<8x64xf32>
    %128 = arith.truncf %127 : vector<8x64xf32> to vector<8x64xbf16>
    %c1_72 = arith.constant 1 : index
    %c0_73 = arith.constant 0 : index
    %c0_74 = arith.constant 0 : index
    %129 = vector.load %arg3[%c1_72, %c0_73, %c0_74] : memref<4x64x128xbf16, #tpu.memory_space<vmem>>, vector<1x64x128xbf16>
    %130 = vector.shape_cast %129 : vector<1x64x128xbf16> to vector<64x128xbf16>
    %cst_75 = arith.constant dense<0.000000e+00> : vector<8x128xf32>
    %131 = tpu.matmul %128, %130, %cst_75 {dimension_numbers = #tpu.dot_dimension_numbers<[1], [0], [0], [1], [0, 0, 1, 1], [], []>} : vector<8x64xbf16>, vector<64x128xbf16>, vector<8x128xf32> -> vector<8x128xf32>
    %c1_76 = arith.constant 1 : index
    %c0_77 = arith.constant 0 : index
    %c0_78 = arith.constant 0 : index
    %132 = vector.load %arg5[%c1_76, %c0_77, %c0_78] : memref<4x1x128xf32, #tpu.memory_space<vmem>>, vector<1x1x128xf32>
    %133 = vector.shape_cast %132 : vector<1x1x128xf32> to vector<1x128xf32>
    %134 = vector.broadcast %133 : vector<1x128xf32> to vector<8x128xf32>
    %135 = arith.addf %131, %134 : vector<8x128xf32>
    %cst_79 = arith.constant 0.000000e+00 : f32
    %136 = vector.broadcast %cst_79 : f32 to vector<8x128xf32>
    %137 = arith.maximumf %135, %136 : vector<8x128xf32>
    %138 = arith.truncf %137 : vector<8x128xf32> to vector<8x128xbf16>
    %c1_80 = arith.constant 1 : index
    %c0_81 = arith.constant 0 : index
    %c0_82 = arith.constant 0 : index
    %139 = vector.load %arg4[%c1_80, %c0_81, %c0_82] : memref<4x128x64xbf16, #tpu.memory_space<vmem>>, vector<1x128x64xbf16>
    %140 = vector.shape_cast %139 : vector<1x128x64xbf16> to vector<128x64xbf16>
    %cst_83 = arith.constant dense<0.000000e+00> : vector<8x64xf32>
    %141 = tpu.matmul %138, %140, %cst_83 {dimension_numbers = #tpu.dot_dimension_numbers<[1], [0], [0], [1], [0, 0, 1, 1], [], []>} : vector<8x128xbf16>, vector<128x64xbf16>, vector<8x64xf32> -> vector<8x64xf32>
    %142 = vector.broadcast %94 : vector<1x64xf32> to vector<8x64xf32>
    %143 = arith.addf %141, %142 : vector<8x64xf32>
    %144 = arith.addf %127, %143 : vector<8x64xf32>
    %cst_84 = arith.constant dense<0.000000e+00> : vector<8xf32>
    %145 = vector.multi_reduction <add>, %144, %cst_84 [1] : vector<8x64xf32> to vector<8xf32>
    %146 = vector.shape_cast %145 : vector<8xf32> to vector<8x1xf32>
    %cst_85 = arith.constant 6.400000e+01 : f32
    %147 = vector.broadcast %cst_85 : f32 to vector<8x1xf32>
    %148 = arith.divf %146, %147 : vector<8x1xf32>
    %149 = vector.broadcast %148 : vector<8x1xf32> to vector<8x64xf32>
    %150 = arith.subf %144, %149 : vector<8x64xf32>
    %151 = arith.mulf %150, %150 : vector<8x64xf32>
    %cst_86 = arith.constant dense<0.000000e+00> : vector<8xf32>
    %152 = vector.multi_reduction <add>, %151, %cst_86 [1] : vector<8x64xf32> to vector<8xf32>
    %153 = vector.shape_cast %152 : vector<8xf32> to vector<8x1xf32>
    %cst_87 = arith.constant 6.400000e+01 : f32
    %154 = vector.broadcast %cst_87 : f32 to vector<8x1xf32>
    %155 = arith.divf %153, %154 : vector<8x1xf32>
    %156 = vector.broadcast %148 : vector<8x1xf32> to vector<8x64xf32>
    %157 = arith.subf %144, %156 : vector<8x64xf32>
    %cst_88 = arith.constant 9.99999974E-6 : f32
    %158 = vector.broadcast %cst_88 : f32 to vector<8x1xf32>
    %159 = arith.addf %155, %158 : vector<8x1xf32>
    %160 = math.rsqrt %159 : vector<8x1xf32>
    %161 = vector.broadcast %160 : vector<8x1xf32> to vector<8x64xf32>
    %162 = arith.mulf %157, %161 : vector<8x64xf32>
    %163 = vector.broadcast %96 : vector<1x64xf32> to vector<8x64xf32>
    %164 = arith.mulf %162, %163 : vector<8x64xf32>
    %165 = vector.broadcast %98 : vector<1x64xf32> to vector<8x64xf32>
    %166 = arith.addf %164, %165 : vector<8x64xf32>
    %c2_89 = arith.constant 2 : index
    %c0_90 = arith.constant 0 : index
    %c0_91 = arith.constant 0 : index
    %167 = vector.load %arg6[%c2_89, %c0_90, %c0_91] : memref<5x8x64xf32, #tpu.memory_space<vmem>>, vector<1x1x64xf32>
    %168 = vector.shape_cast %167 : vector<1x1x64xf32> to vector<1x64xf32>
    %c2_92 = arith.constant 2 : index
    %c1_93 = arith.constant 1 : index
    %c0_94 = arith.constant 0 : index
    %169 = vector.load %arg6[%c2_92, %c1_93, %c0_94] : memref<5x8x64xf32, #tpu.memory_space<vmem>>, vector<1x1x64xf32>
    %170 = vector.shape_cast %169 : vector<1x1x64xf32> to vector<1x64xf32>
    %c2_95 = arith.constant 2 : index
    %c2_96 = arith.constant 2 : index
    %c0_97 = arith.constant 0 : index
    %171 = vector.load %arg6[%c2_95, %c2_96, %c0_97] : memref<5x8x64xf32, #tpu.memory_space<vmem>>, vector<1x1x64xf32>
    %172 = vector.shape_cast %171 : vector<1x1x64xf32> to vector<1x64xf32>
    %c2_98 = arith.constant 2 : index
    %c3_99 = arith.constant 3 : index
    %c0_100 = arith.constant 0 : index
    %173 = vector.load %arg6[%c2_98, %c3_99, %c0_100] : memref<5x8x64xf32, #tpu.memory_space<vmem>>, vector<1x1x64xf32>
    %174 = vector.shape_cast %173 : vector<1x1x64xf32> to vector<1x64xf32>
    %c2_101 = arith.constant 2 : index
    %c4_102 = arith.constant 4 : index
    %c0_103 = arith.constant 0 : index
    %175 = vector.load %arg6[%c2_101, %c4_102, %c0_103] : memref<5x8x64xf32, #tpu.memory_space<vmem>>, vector<1x1x64xf32>
    %176 = vector.shape_cast %175 : vector<1x1x64xf32> to vector<1x64xf32>
    %c2_104 = arith.constant 2 : index
    %c5_105 = arith.constant 5 : index
    %c0_106 = arith.constant 0 : index
    %177 = vector.load %arg6[%c2_104, %c5_105, %c0_106] : memref<5x8x64xf32, #tpu.memory_space<vmem>>, vector<1x1x64xf32>
    %178 = vector.shape_cast %177 : vector<1x1x64xf32> to vector<1x64xf32>
    %179 = arith.truncf %166 : vector<8x64xf32> to vector<8x64xbf16>
    %c2_107 = arith.constant 2 : index
    %c0_108 = arith.constant 0 : index
    %c0_109 = arith.constant 0 : index
    %180 = vector.load %arg2[%c2_107, %c0_108, %c0_109] : memref<4x64x64xbf16, #tpu.memory_space<vmem>>, vector<1x64x64xbf16>
    %181 = vector.shape_cast %180 : vector<1x64x64xbf16> to vector<64x64xbf16>
    %cst_110 = arith.constant dense<0.000000e+00> : vector<8x64xf32>
    %182 = tpu.matmul %179, %181, %cst_110 {dimension_numbers = #tpu.dot_dimension_numbers<[1], [0], [0], [1], [0, 0, 1, 1], [], []>} : vector<8x64xbf16>, vector<64x64xbf16>, vector<8x64xf32> -> vector<8x64xf32>
    %183 = vector.broadcast %168 : vector<1x64xf32> to vector<8x64xf32>
    %184 = arith.addf %182, %183 : vector<8x64xf32>
    %185 = arith.addf %166, %184 : vector<8x64xf32>
    %cst_111 = arith.constant dense<0.000000e+00> : vector<8xf32>
    %186 = vector.multi_reduction <add>, %185, %cst_111 [1] : vector<8x64xf32> to vector<8xf32>
    %187 = vector.shape_cast %186 : vector<8xf32> to vector<8x1xf32>
    %cst_112 = arith.constant 6.400000e+01 : f32
    %188 = vector.broadcast %cst_112 : f32 to vector<8x1xf32>
    %189 = arith.divf %187, %188 : vector<8x1xf32>
    %190 = vector.broadcast %189 : vector<8x1xf32> to vector<8x64xf32>
    %191 = arith.subf %185, %190 : vector<8x64xf32>
    %192 = arith.mulf %191, %191 : vector<8x64xf32>
    %cst_113 = arith.constant dense<0.000000e+00> : vector<8xf32>
    %193 = vector.multi_reduction <add>, %192, %cst_113 [1] : vector<8x64xf32> to vector<8xf32>
    %194 = vector.shape_cast %193 : vector<8xf32> to vector<8x1xf32>
    %cst_114 = arith.constant 6.400000e+01 : f32
    %195 = vector.broadcast %cst_114 : f32 to vector<8x1xf32>
    %196 = arith.divf %194, %195 : vector<8x1xf32>
    %197 = vector.broadcast %189 : vector<8x1xf32> to vector<8x64xf32>
    %198 = arith.subf %185, %197 : vector<8x64xf32>
    %cst_115 = arith.constant 9.99999974E-6 : f32
    %199 = vector.broadcast %cst_115 : f32 to vector<8x1xf32>
    %200 = arith.addf %196, %199 : vector<8x1xf32>
    %201 = math.rsqrt %200 : vector<8x1xf32>
    %202 = vector.broadcast %201 : vector<8x1xf32> to vector<8x64xf32>
    %203 = arith.mulf %198, %202 : vector<8x64xf32>
    %204 = vector.broadcast %170 : vector<1x64xf32> to vector<8x64xf32>
    %205 = arith.mulf %203, %204 : vector<8x64xf32>
    %206 = vector.broadcast %172 : vector<1x64xf32> to vector<8x64xf32>
    %207 = arith.addf %205, %206 : vector<8x64xf32>
    %208 = arith.truncf %207 : vector<8x64xf32> to vector<8x64xbf16>
    %c2_116 = arith.constant 2 : index
    %c0_117 = arith.constant 0 : index
    %c0_118 = arith.constant 0 : index
    %209 = vector.load %arg3[%c2_116, %c0_117, %c0_118] : memref<4x64x128xbf16, #tpu.memory_space<vmem>>, vector<1x64x128xbf16>
    %210 = vector.shape_cast %209 : vector<1x64x128xbf16> to vector<64x128xbf16>
    %cst_119 = arith.constant dense<0.000000e+00> : vector<8x128xf32>
    %211 = tpu.matmul %208, %210, %cst_119 {dimension_numbers = #tpu.dot_dimension_numbers<[1], [0], [0], [1], [0, 0, 1, 1], [], []>} : vector<8x64xbf16>, vector<64x128xbf16>, vector<8x128xf32> -> vector<8x128xf32>
    %c2_120 = arith.constant 2 : index
    %c0_121 = arith.constant 0 : index
    %c0_122 = arith.constant 0 : index
    %212 = vector.load %arg5[%c2_120, %c0_121, %c0_122] : memref<4x1x128xf32, #tpu.memory_space<vmem>>, vector<1x1x128xf32>
    %213 = vector.shape_cast %212 : vector<1x1x128xf32> to vector<1x128xf32>
    %214 = vector.broadcast %213 : vector<1x128xf32> to vector<8x128xf32>
    %215 = arith.addf %211, %214 : vector<8x128xf32>
    %cst_123 = arith.constant 0.000000e+00 : f32
    %216 = vector.broadcast %cst_123 : f32 to vector<8x128xf32>
    %217 = arith.maximumf %215, %216 : vector<8x128xf32>
    %218 = arith.truncf %217 : vector<8x128xf32> to vector<8x128xbf16>
    %c2_124 = arith.constant 2 : index
    %c0_125 = arith.constant 0 : index
    %c0_126 = arith.constant 0 : index
    %219 = vector.load %arg4[%c2_124, %c0_125, %c0_126] : memref<4x128x64xbf16, #tpu.memory_space<vmem>>, vector<1x128x64xbf16>
    %220 = vector.shape_cast %219 : vector<1x128x64xbf16> to vector<128x64xbf16>
    %cst_127 = arith.constant dense<0.000000e+00> : vector<8x64xf32>
    %221 = tpu.matmul %218, %220, %cst_127 {dimension_numbers = #tpu.dot_dimension_numbers<[1], [0], [0], [1], [0, 0, 1, 1], [], []>} : vector<8x128xbf16>, vector<128x64xbf16>, vector<8x64xf32> -> vector<8x64xf32>
    %222 = vector.broadcast %174 : vector<1x64xf32> to vector<8x64xf32>
    %223 = arith.addf %221, %222 : vector<8x64xf32>
    %224 = arith.addf %207, %223 : vector<8x64xf32>
    %cst_128 = arith.constant dense<0.000000e+00> : vector<8xf32>
    %225 = vector.multi_reduction <add>, %224, %cst_128 [1] : vector<8x64xf32> to vector<8xf32>
    %226 = vector.shape_cast %225 : vector<8xf32> to vector<8x1xf32>
    %cst_129 = arith.constant 6.400000e+01 : f32
    %227 = vector.broadcast %cst_129 : f32 to vector<8x1xf32>
    %228 = arith.divf %226, %227 : vector<8x1xf32>
    %229 = vector.broadcast %228 : vector<8x1xf32> to vector<8x64xf32>
    %230 = arith.subf %224, %229 : vector<8x64xf32>
    %231 = arith.mulf %230, %230 : vector<8x64xf32>
    %cst_130 = arith.constant dense<0.000000e+00> : vector<8xf32>
    %232 = vector.multi_reduction <add>, %231, %cst_130 [1] : vector<8x64xf32> to vector<8xf32>
    %233 = vector.shape_cast %232 : vector<8xf32> to vector<8x1xf32>
    %cst_131 = arith.constant 6.400000e+01 : f32
    %234 = vector.broadcast %cst_131 : f32 to vector<8x1xf32>
    %235 = arith.divf %233, %234 : vector<8x1xf32>
    %236 = vector.broadcast %228 : vector<8x1xf32> to vector<8x64xf32>
    %237 = arith.subf %224, %236 : vector<8x64xf32>
    %cst_132 = arith.constant 9.99999974E-6 : f32
    %238 = vector.broadcast %cst_132 : f32 to vector<8x1xf32>
    %239 = arith.addf %235, %238 : vector<8x1xf32>
    %240 = math.rsqrt %239 : vector<8x1xf32>
    %241 = vector.broadcast %240 : vector<8x1xf32> to vector<8x64xf32>
    %242 = arith.mulf %237, %241 : vector<8x64xf32>
    %243 = vector.broadcast %176 : vector<1x64xf32> to vector<8x64xf32>
    %244 = arith.mulf %242, %243 : vector<8x64xf32>
    %245 = vector.broadcast %178 : vector<1x64xf32> to vector<8x64xf32>
    %246 = arith.addf %244, %245 : vector<8x64xf32>
    %c3_133 = arith.constant 3 : index
    %c0_134 = arith.constant 0 : index
    %c0_135 = arith.constant 0 : index
    %247 = vector.load %arg6[%c3_133, %c0_134, %c0_135] : memref<5x8x64xf32, #tpu.memory_space<vmem>>, vector<1x1x64xf32>
    %248 = vector.shape_cast %247 : vector<1x1x64xf32> to vector<1x64xf32>
    %c3_136 = arith.constant 3 : index
    %c1_137 = arith.constant 1 : index
    %c0_138 = arith.constant 0 : index
    %249 = vector.load %arg6[%c3_136, %c1_137, %c0_138] : memref<5x8x64xf32, #tpu.memory_space<vmem>>, vector<1x1x64xf32>
    %250 = vector.shape_cast %249 : vector<1x1x64xf32> to vector<1x64xf32>
    %c3_139 = arith.constant 3 : index
    %c2_140 = arith.constant 2 : index
    %c0_141 = arith.constant 0 : index
    %251 = vector.load %arg6[%c3_139, %c2_140, %c0_141] : memref<5x8x64xf32, #tpu.memory_space<vmem>>, vector<1x1x64xf32>
    %252 = vector.shape_cast %251 : vector<1x1x64xf32> to vector<1x64xf32>
    %c3_142 = arith.constant 3 : index
    %c3_143 = arith.constant 3 : index
    %c0_144 = arith.constant 0 : index
    %253 = vector.load %arg6[%c3_142, %c3_143, %c0_144] : memref<5x8x64xf32, #tpu.memory_space<vmem>>, vector<1x1x64xf32>
    %254 = vector.shape_cast %253 : vector<1x1x64xf32> to vector<1x64xf32>
    %c3_145 = arith.constant 3 : index
    %c4_146 = arith.constant 4 : index
    %c0_147 = arith.constant 0 : index
    %255 = vector.load %arg6[%c3_145, %c4_146, %c0_147] : memref<5x8x64xf32, #tpu.memory_space<vmem>>, vector<1x1x64xf32>
    %256 = vector.shape_cast %255 : vector<1x1x64xf32> to vector<1x64xf32>
    %c3_148 = arith.constant 3 : index
    %c5_149 = arith.constant 5 : index
    %c0_150 = arith.constant 0 : index
    %257 = vector.load %arg6[%c3_148, %c5_149, %c0_150] : memref<5x8x64xf32, #tpu.memory_space<vmem>>, vector<1x1x64xf32>
    %258 = vector.shape_cast %257 : vector<1x1x64xf32> to vector<1x64xf32>
    %259 = arith.truncf %246 : vector<8x64xf32> to vector<8x64xbf16>
    %c3_151 = arith.constant 3 : index
    %c0_152 = arith.constant 0 : index
    %c0_153 = arith.constant 0 : index
    %260 = vector.load %arg2[%c3_151, %c0_152, %c0_153] : memref<4x64x64xbf16, #tpu.memory_space<vmem>>, vector<1x64x64xbf16>
    %261 = vector.shape_cast %260 : vector<1x64x64xbf16> to vector<64x64xbf16>
    %cst_154 = arith.constant dense<0.000000e+00> : vector<8x64xf32>
    %262 = tpu.matmul %259, %261, %cst_154 {dimension_numbers = #tpu.dot_dimension_numbers<[1], [0], [0], [1], [0, 0, 1, 1], [], []>} : vector<8x64xbf16>, vector<64x64xbf16>, vector<8x64xf32> -> vector<8x64xf32>
    %263 = vector.broadcast %248 : vector<1x64xf32> to vector<8x64xf32>
    %264 = arith.addf %262, %263 : vector<8x64xf32>
    %265 = arith.addf %246, %264 : vector<8x64xf32>
    %cst_155 = arith.constant dense<0.000000e+00> : vector<8xf32>
    %266 = vector.multi_reduction <add>, %265, %cst_155 [1] : vector<8x64xf32> to vector<8xf32>
    %267 = vector.shape_cast %266 : vector<8xf32> to vector<8x1xf32>
    %cst_156 = arith.constant 6.400000e+01 : f32
    %268 = vector.broadcast %cst_156 : f32 to vector<8x1xf32>
    %269 = arith.divf %267, %268 : vector<8x1xf32>
    %270 = vector.broadcast %269 : vector<8x1xf32> to vector<8x64xf32>
    %271 = arith.subf %265, %270 : vector<8x64xf32>
    %272 = arith.mulf %271, %271 : vector<8x64xf32>
    %cst_157 = arith.constant dense<0.000000e+00> : vector<8xf32>
    %273 = vector.multi_reduction <add>, %272, %cst_157 [1] : vector<8x64xf32> to vector<8xf32>
    %274 = vector.shape_cast %273 : vector<8xf32> to vector<8x1xf32>
    %cst_158 = arith.constant 6.400000e+01 : f32
    %275 = vector.broadcast %cst_158 : f32 to vector<8x1xf32>
    %276 = arith.divf %274, %275 : vector<8x1xf32>
    %277 = vector.broadcast %269 : vector<8x1xf32> to vector<8x64xf32>
    %278 = arith.subf %265, %277 : vector<8x64xf32>
    %cst_159 = arith.constant 9.99999974E-6 : f32
    %279 = vector.broadcast %cst_159 : f32 to vector<8x1xf32>
    %280 = arith.addf %276, %279 : vector<8x1xf32>
    %281 = math.rsqrt %280 : vector<8x1xf32>
    %282 = vector.broadcast %281 : vector<8x1xf32> to vector<8x64xf32>
    %283 = arith.mulf %278, %282 : vector<8x64xf32>
    %284 = vector.broadcast %250 : vector<1x64xf32> to vector<8x64xf32>
    %285 = arith.mulf %283, %284 : vector<8x64xf32>
    %286 = vector.broadcast %252 : vector<1x64xf32> to vector<8x64xf32>
    %287 = arith.addf %285, %286 : vector<8x64xf32>
    %288 = arith.truncf %287 : vector<8x64xf32> to vector<8x64xbf16>
    %c3_160 = arith.constant 3 : index
    %c0_161 = arith.constant 0 : index
    %c0_162 = arith.constant 0 : index
    %289 = vector.load %arg3[%c3_160, %c0_161, %c0_162] : memref<4x64x128xbf16, #tpu.memory_space<vmem>>, vector<1x64x128xbf16>
    %290 = vector.shape_cast %289 : vector<1x64x128xbf16> to vector<64x128xbf16>
    %cst_163 = arith.constant dense<0.000000e+00> : vector<8x128xf32>
    %291 = tpu.matmul %288, %290, %cst_163 {dimension_numbers = #tpu.dot_dimension_numbers<[1], [0], [0], [1], [0, 0, 1, 1], [], []>} : vector<8x64xbf16>, vector<64x128xbf16>, vector<8x128xf32> -> vector<8x128xf32>
    %c3_164 = arith.constant 3 : index
    %c0_165 = arith.constant 0 : index
    %c0_166 = arith.constant 0 : index
    %292 = vector.load %arg5[%c3_164, %c0_165, %c0_166] : memref<4x1x128xf32, #tpu.memory_space<vmem>>, vector<1x1x128xf32>
    %293 = vector.shape_cast %292 : vector<1x1x128xf32> to vector<1x128xf32>
    %294 = vector.broadcast %293 : vector<1x128xf32> to vector<8x128xf32>
    %295 = arith.addf %291, %294 : vector<8x128xf32>
    %cst_167 = arith.constant 0.000000e+00 : f32
    %296 = vector.broadcast %cst_167 : f32 to vector<8x128xf32>
    %297 = arith.maximumf %295, %296 : vector<8x128xf32>
    %298 = arith.truncf %297 : vector<8x128xf32> to vector<8x128xbf16>
    %c3_168 = arith.constant 3 : index
    %c0_169 = arith.constant 0 : index
    %c0_170 = arith.constant 0 : index
    %299 = vector.load %arg4[%c3_168, %c0_169, %c0_170] : memref<4x128x64xbf16, #tpu.memory_space<vmem>>, vector<1x128x64xbf16>
    %300 = vector.shape_cast %299 : vector<1x128x64xbf16> to vector<128x64xbf16>
    %cst_171 = arith.constant dense<0.000000e+00> : vector<8x64xf32>
    %301 = tpu.matmul %298, %300, %cst_171 {dimension_numbers = #tpu.dot_dimension_numbers<[1], [0], [0], [1], [0, 0, 1, 1], [], []>} : vector<8x128xbf16>, vector<128x64xbf16>, vector<8x64xf32> -> vector<8x64xf32>
    %302 = vector.broadcast %254 : vector<1x64xf32> to vector<8x64xf32>
    %303 = arith.addf %301, %302 : vector<8x64xf32>
    %304 = arith.addf %287, %303 : vector<8x64xf32>
    %cst_172 = arith.constant dense<0.000000e+00> : vector<8xf32>
    %305 = vector.multi_reduction <add>, %304, %cst_172 [1] : vector<8x64xf32> to vector<8xf32>
    %306 = vector.shape_cast %305 : vector<8xf32> to vector<8x1xf32>
    %cst_173 = arith.constant 6.400000e+01 : f32
    %307 = vector.broadcast %cst_173 : f32 to vector<8x1xf32>
    %308 = arith.divf %306, %307 : vector<8x1xf32>
    %309 = vector.broadcast %308 : vector<8x1xf32> to vector<8x64xf32>
    %310 = arith.subf %304, %309 : vector<8x64xf32>
    %311 = arith.mulf %310, %310 : vector<8x64xf32>
    %cst_174 = arith.constant dense<0.000000e+00> : vector<8xf32>
    %312 = vector.multi_reduction <add>, %311, %cst_174 [1] : vector<8x64xf32> to vector<8xf32>
    %313 = vector.shape_cast %312 : vector<8xf32> to vector<8x1xf32>
    %cst_175 = arith.constant 6.400000e+01 : f32
    %314 = vector.broadcast %cst_175 : f32 to vector<8x1xf32>
    %315 = arith.divf %313, %314 : vector<8x1xf32>
    %316 = vector.broadcast %308 : vector<8x1xf32> to vector<8x64xf32>
    %317 = arith.subf %304, %316 : vector<8x64xf32>
    %cst_176 = arith.constant 9.99999974E-6 : f32
    %318 = vector.broadcast %cst_176 : f32 to vector<8x1xf32>
    %319 = arith.addf %315, %318 : vector<8x1xf32>
    %320 = math.rsqrt %319 : vector<8x1xf32>
    %321 = vector.broadcast %320 : vector<8x1xf32> to vector<8x64xf32>
    %322 = arith.mulf %317, %321 : vector<8x64xf32>
    %323 = vector.broadcast %256 : vector<1x64xf32> to vector<8x64xf32>
    %324 = arith.mulf %322, %323 : vector<8x64xf32>
    %325 = vector.broadcast %258 : vector<1x64xf32> to vector<8x64xf32>
    %326 = arith.addf %324, %325 : vector<8x64xf32>
    %c4_177 = arith.constant 4 : index
    %c1_178 = arith.constant 1 : index
    %c0_179 = arith.constant 0 : index
    %327 = vector.load %arg6[%c4_177, %c1_178, %c0_179] : memref<5x8x64xf32, #tpu.memory_space<vmem>>, vector<1x1x64xf32>
    %328 = vector.shape_cast %327 : vector<1x1x64xf32> to vector<1x64xf32>
    %c4_180 = arith.constant 4 : index
    %c2_181 = arith.constant 2 : index
    %c0_182 = arith.constant 0 : index
    %329 = vector.load %arg6[%c4_180, %c2_181, %c0_182] : memref<5x8x64xf32, #tpu.memory_space<vmem>>, vector<1x1x1xf32>
    %330 = vector.shape_cast %329 : vector<1x1x1xf32> to vector<1x1xf32>
    %331 = vector.broadcast %328 : vector<1x64xf32> to vector<8x64xf32>
    %332 = arith.mulf %326, %331 : vector<8x64xf32>
    %cst_183 = arith.constant dense<0.000000e+00> : vector<8xf32>
    %333 = vector.multi_reduction <add>, %332, %cst_183 [1] : vector<8x64xf32> to vector<8xf32>
    %334 = vector.shape_cast %333 : vector<8xf32> to vector<8x1xf32>
    %335 = vector.broadcast %330 : vector<1x1xf32> to vector<8x1xf32>
    %336 = arith.addf %334, %335 : vector<8x1xf32>
    %337 = arith.negf %336 : vector<8x1xf32>
    %338 = math.exp %337 : vector<8x1xf32>
    %cst_184 = arith.constant 1.000000e+00 : f32
    %339 = vector.broadcast %cst_184 : f32 to vector<8x1xf32>
    %340 = arith.addf %339, %338 : vector<8x1xf32>
    %341 = arith.divf %339, %340 : vector<8x1xf32>
    %c0_185 = arith.constant 0 : index
    %c0_186 = arith.constant 0 : index
    %342 = vector.load %arg7[%c0_185, %c0_186] : memref<8x1xf32, #tpu.memory_space<vmem>>, vector<8x1xf32>
    tpu.vector_store %arg7[%c0_185, %c0_186], %341 {strides = array<i32>} : memref<8x1xf32, #tpu.memory_space<vmem>>, vector<8x1xf32>,
    return
  }
}

</mosaic_0001>

<llo_original>
// kernel: tpu_custom_call.1
$region0: #{tpu_custom_call.1}
  #allocation0 [shape = 'u32[]', space=smem, size = 0x4, offset = 0x4, fixed_abs, tag = 'smem constant byte address 0x4 - core index']
  #allocation1 [shape = 'u32[144,128]{1,0:T(1,128)}', space=vmem, size = 0x12000, scoped, tag = 'internal scratch']
  %s0 = inlined_call_operand.vmem [shape: bf16[8,16], index: 0, kind: input, shape index: {}]
  %s1 = inlined_call_operand.vmem [shape: bf16[16,64], index: 1, kind: input, shape index: {}]
  %s2 = inlined_call_operand.vmem [shape: bf16[4,64,64], index: 2, kind: input, shape index: {}]
  %s3 = inlined_call_operand.vmem [shape: bf16[4,64,128], index: 3, kind: input, shape index: {}]
  %s4 = inlined_call_operand.vmem [shape: bf16[4,128,64], index: 4, kind: input, shape index: {}]
  %s5 = inlined_call_operand.vmem [shape: f32[4,1,128], index: 5, kind: input, shape index: {}]
  %s6 = inlined_call_operand.vmem [shape: f32[5,8,64], index: 6, kind: input, shape index: {}]
  %s7 = inlined_call_operand.vmem [shape: f32[8,1], index: 7, kind: output, shape index: {}]
  %s8 = sld [smem:[#allocation0]]
  $region38: #{tpu_custom_call.1} parent=0
    _
  %s10 = ssub.s32 1, %s8
  %s11 = scalar_select 0, %s10, %s8
  // Predicated region
  $region2: #{tpu_custom_call.1} parent=0 // pred_check
    _
  $region3: #{tpu_custom_call.1} parent=0 // pred_check_branch
    %13 = sbr.rel (0) target = $region5
  $region4: #{tpu_custom_call.1} parent=0 // pred_region
    _
  $region5: #{tpu_custom_call.1} parent=0 // pred_fallthru
    _
  // Predicated region
  $region6: #{tpu_custom_call.1} parent=0 // pred_check
    _
  $region7: #{tpu_custom_call.1} parent=0 // pred_check_branch
    %15 = sbr.rel (0) target = $region9
  $region8: #{tpu_custom_call.1} parent=0 // pred_region
    _
  $region9: #{tpu_custom_call.1} parent=0 // pred_fallthru
    _
  // Predicated region
  $region10: #{tpu_custom_call.1} parent=0 // pred_check
    _
  $region11: #{tpu_custom_call.1} parent=0 // pred_check_branch
    %17 = sbr.rel (0) target = $region13
  $region12: #{tpu_custom_call.1} parent=0 // pred_region
    _
  $region13: #{tpu_custom_call.1} parent=0 // pred_fallthru
    _
  // Predicated region
  $region14: #{tpu_custom_call.1} parent=0 // pred_check
    _
  $region15: #{tpu_custom_call.1} parent=0 // pred_check_branch
    %19 = sbr.rel (0) target = $region17
  $region16: #{tpu_custom_call.1} parent=0 // pred_region
    _
  $region17: #{tpu_custom_call.1} parent=0 // pred_fallthru
    _
  // Predicated region
  $region18: #{tpu_custom_call.1} parent=0 // pred_check
    _
  $region19: #{tpu_custom_call.1} parent=0 // pred_check_branch
    %21 = sbr.rel (0) target = $region21
  $region20: #{tpu_custom_call.1} parent=0 // pred_region
    _
  $region21: #{tpu_custom_call.1} parent=0 // pred_fallthru
    _
  // Predicated region
  $region22: #{tpu_custom_call.1} parent=0 // pred_check
    _
  $region23: #{tpu_custom_call.1} parent=0 // pred_check_branch
    %23 = sbr.rel (0) target = $region25
  $region24: #{tpu_custom_call.1} parent=0 // pred_region
    _
  $region25: #{tpu_custom_call.1} parent=0 // pred_fallthru
    _
  // Predicated region
  $region26: #{tpu_custom_call.1} parent=0 // pred_check
    _
  $region27: #{tpu_custom_call.1} parent=0 // pred_check_branch
    %25 = sbr.rel (0) target = $region29
  $region28: #{tpu_custom_call.1} parent=0 // pred_region
    _
  $region29: #{tpu_custom_call.1} parent=0 // pred_fallthru
    _
  %v27 = vld [vmem:[%s0] sm:$0xf]
  %v28 = vld [vmem:[%s1] sm:$0xf]
  %v29 = vld [vmem:[%s1 + $0x4] sm:$0xf]
  %s30 = scalar_lea.vmem %s6, 32
  %v31 = vld [vmem:[%s30] sm:$0x1]
  %v32 = vlaneseq
  %v33 = vshrl.u32 %v32, 7
  %v34 = vsub.s32 0, %v33
  %v35 = vrot.slane %v31, %v34
  %v38 = vunpack.c.l.b16 %v28
  %v39 = vunpack.c.l.b16 %v29
  %v40 = vpack.c.b16 %v39, %v38
  %vm42 = vcmask 130048
  %v44 = vsel %vm42, %v27, 0
  %46 = vmatprep.subr.bf16.mxu0 0
  %47 = vmatpush1.bf16.msra.mxu0 0
  %48 = vmatprep.subr.bf16.mxu0 0
  %49 = vmatpush1.bf16.msra.mxu0 0
  %50 = vmatprep.subr.bf16.mxu0 0
  %51 = vmatpush1.bf16.msra.mxu0 0
  %52 = vmatprep.subr.bf16.mxu0 0
  %53 = vmatpush1.bf16.msra.mxu0 0
  %54 = vmatprep.subr.bf16.mxu0 0
  %55 = vmatpush1.bf16.msra.mxu0 0
  %56 = vmatprep.subr.bf16.mxu0 0
  %57 = vmatpush1.bf16.msra.mxu0 0
  %58 = vmatprep.subr.bf16.mxu0 0
  %59 = vmatpush1.bf16.msra.mxu0 0
  %60 = vmatprep.subr.bf16.mxu0 0
  %61 = vmatpush1.bf16.msra.mxu0 %v40
  %62 = vmatprep.subr.bf16.mxu0 0
  %63 = vmatpush2.bf16.msra.mxu0 0
  %64 = vmatprep.subr.bf16.mxu0 0
  %65 = vmatpush2.bf16.msra.mxu0 0
  %66 = vmatprep.subr.bf16.mxu0 0
  %67 = vmatpush2.bf16.msra.mxu0 0
  %68 = vmatprep.subr.bf16.mxu0 0
  %69 = vmatpush2.bf16.msra.mxu0 0
  %70 = vmatprep.subr.bf16.mxu0 0
  %71 = vmatpush2.bf16.msra.mxu0 0
  %72 = vmatprep.subr.bf16.mxu0 0
  %73 = vmatpush2.bf16.msra.mxu0 0
  %74 = vmatprep.subr.bf16.mxu0 0
  %75 = vmatpush2.bf16.msra.mxu0 0
  %76 = vmatprep.subr.bf16.mxu0 0
  %77 = vmatpush2.bf16.msra.mxu0 0
  %78 = vmatprep.mubr.bf16.mxu0 0
  %79 = vmatmul.mubr.bf16.gmra.mxu0 %v44
  %v80 = vpop.f32.mrf.mxu0
  %v81 = vadd.f32 %v35, %v80
  %v82 = vpop.f32.mrf.mxu0
  %v83 = vpop.f32.mrf.mxu0
  %v84 = vpop.f32.mrf.mxu0
  %85 = vdwg.mxu0
  %v86 = vld [vmem:[%s6] sm:$0x1]
  %v87 = vld [vmem:[%s6 + $0x1] sm:$0x1]
  %v88 = vld [vmem:[%s6 + $0x2] sm:$0x1]
  %v89 = vld [vmem:[%s6 + $0x3] sm:$0x1]
  %v90 = vld [vmem:[%s6 + $0x4] sm:$0x1]
  %v91 = vld [vmem:[%s6 + $0x5] sm:$0x1]
  %v92 = vpack.c.bf16 %v81, %v81
  %v93 = vld [vmem:[%s2] sm:$0xf]
  %v94 = vld [vmem:[%s2 + $0x4] sm:$0xf]
  %v95 = vld [vmem:[%s2 + $0x8] sm:$0xf]
  %v96 = vld [vmem:[%s2 + $0xc] sm:$0xf]
  %v97 = vld [vmem:[%s2 + $0x10] sm:$0xf]
  %v98 = vld [vmem:[%s2 + $0x14] sm:$0xf]
  %v99 = vld [vmem:[%s2 + $0x18] sm:$0xf]
  %v100 = vld [vmem:[%s2 + $0x1c] sm:$0xf]
  %v101 = vlaneseq
  %v102 = vshrl.u32 %v101, 7
  %v103 = vsub.s32 0, %v102
  %v104 = vrot.slane %v86, %v103
  %v113 = vunpack.c.l.b16 %v93
  %v114 = vunpack.c.l.b16 %v94
  %v115 = vunpack.c.l.b16 %v95
  %v116 = vunpack.c.l.b16 %v96
  %v117 = vunpack.c.l.b16 %v97
  %v118 = vunpack.c.l.b16 %v98
  %v119 = vunpack.c.l.b16 %v99
  %v120 = vunpack.c.l.b16 %v100
  %v121 = vpack.c.b16 %v114, %v113
  %v122 = vpack.c.b16 %v116, %v115
  %v123 = vpack.c.b16 %v118, %v117
  %v124 = vpack.c.b16 %v120, %v119
  %vm129 = vcmask 523264
  %v131 = vsel %vm129, %v92, 0
  %133 = vmatprep.subr.bf16.mxu0 0
  %134 = vmatpush1.bf16.msra.mxu0 0
  %135 = vmatprep.subr.bf16.mxu0 0
  %136 = vmatpush1.bf16.msra.mxu0 0
  %137 = vmatprep.subr.bf16.mxu0 0
  %138 = vmatpush1.bf16.msra.mxu0 0
  %139 = vmatprep.subr.bf16.mxu0 0
  %140 = vmatpush1.bf16.msra.mxu0 0
  %141 = vmatprep.subr.bf16.mxu0 0
  %142 = vmatpush1.bf16.msra.mxu0 %v124
  %143 = vmatprep.subr.bf16.mxu0 0
  %144 = vmatpush1.bf16.msra.mxu0 %v123
  %145 = vmatprep.subr.bf16.mxu0 0
  %146 = vmatpush1.bf16.msra.mxu0 %v122
  %147 = vmatprep.subr.bf16.mxu0 0
  %148 = vmatpush1.bf16.msra.mxu0 %v121
  %149 = vmatprep.subr.bf16.mxu0 0
  %150 = vmatpush2.bf16.msra.mxu0 0
  %151 = vmatprep.subr.bf16.mxu0 0
  %152 = vmatpush2.bf16.msra.mxu0 0
  %153 = vmatprep.subr.bf16.mxu0 0
  %154 = vmatpush2.bf16.msra.mxu0 0
  %155 = vmatprep.subr.bf16.mxu0 0
  %156 = vmatpush2.bf16.msra.mxu0 0
  %157 = vmatprep.subr.bf16.mxu0 0
  %158 = vmatpush2.bf16.msra.mxu0 0
  %159 = vmatprep.subr.bf16.mxu0 0
  %160 = vmatpush2.bf16.msra.mxu0 0
  %161 = vmatprep.subr.bf16.mxu0 0
  %162 = vmatpush2.bf16.msra.mxu0 0
  %163 = vmatprep.subr.bf16.mxu0 0
  %164 = vmatpush2.bf16.msra.mxu0 0
  %165 = vmatprep.mubr.bf16.mxu0 0
  %166 = vmatmul.mubr.bf16.gmra.mxu0 %v131
  %v167 = vpop.f32.mrf.mxu0
  %v168 = vadd.f32 %v104, %v167
  %v169 = vpop.f32.mrf.mxu0
  %v170 = vpop.f32.mrf.mxu0
  %v171 = vpop.f32.mrf.mxu0
  %172 = vdwg.mxu0
  %v173 = vadd.f32 %v81, %v168
  %v174 = vsel %vm129, %v173, 0.0
  %175 = vadd.xlane.f32.xlu0 %v174
  %v176 = vpop.xlane.xlu0 %175
  %v177 = vrcp.pop 64.0
  %v178 = vmul.f32 %v176, %v177
  %v179 = vsub.f32 %v173, %v178
  %v180 = vmul.f32 %v179, %v179
  %v181 = vsel %vm129, %v180, 0.0
  %182 = vadd.xlane.f32.xlu0 %v181
  %v183 = vpop.xlane.xlu0 %182
  %v184 = vmul.f32 %v183, %v177
  %v185 = vadd.f32 %v184, 1e-05
  %v186 = vrsqrt.pop %v185
  %v187 = vmul.f32 %v179, %v186
  %v188 = vlaneseq
  %v189 = vshrl.u32 %v188, 7
  %v190 = vsub.s32 0, %v189
  %v191 = vrot.slane %v87, %v190
  %v192 = vmul.f32 %v187, %v191
  %v193 = vlaneseq
  %v194 = vshrl.u32 %v193, 7
  %v195 = vsub.s32 0, %v194
  %v196 = vrot.slane %v88, %v195
  %v197 = vadd.f32 %v192, %v196
  %v198 = vpack.c.bf16 %v197, %v197
  %v199 = vld [vmem:[%s3] sm:$0xf]
  %v200 = vld [vmem:[%s3 + $0x4] sm:$0xf]
  %v201 = vld [vmem:[%s3 + $0x8] sm:$0xf]
  %v202 = vld [vmem:[%s3 + $0xc] sm:$0xf]
  %v203 = vld [vmem:[%s3 + $0x10] sm:$0xf]
  %v204 = vld [vmem:[%s3 + $0x14] sm:$0xf]
  %v205 = vld [vmem:[%s3 + $0x18] sm:$0xf]
  %v206 = vld [vmem:[%s3 + $0x1c] sm:$0xf]
  %v207 = vld [vmem:[%s5] sm:$0x1]
  %v209 = vlaneseq
  %v210 = vshrl.u32 %v209, 7
  %v211 = vsub.s32 0, %v210
  %v212 = vrot.slane %v207, %v211
  %v222 = vunpack.c.l.b16 %v199
  %v223 = vunpack.c.l.b16 %v200
  %v224 = vunpack.c.l.b16 %v201
  %v225 = vunpack.c.l.b16 %v202
  %v226 = vunpack.c.l.b16 %v203
  %v227 = vunpack.c.l.b16 %v204
  %v228 = vunpack.c.l.b16 %v205
  %v229 = vunpack.c.l.b16 %v206
  %v230 = vpack.c.b16 %v223, %v222
  %v231 = vpack.c.b16 %v225, %v224
  %v232 = vpack.c.b16 %v227, %v226
  %v233 = vpack.c.b16 %v229, %v228
  %v239 = vsel %vm129, %v198, 0
  %241 = vmatprep.subr.bf16.mxu0 0
  %242 = vmatpush1.bf16.msra.mxu0 0
  %243 = vmatprep.subr.bf16.mxu0 0
  %244 = vmatpush1.bf16.msra.mxu0 0
  %245 = vmatprep.subr.bf16.mxu0 0
  %246 = vmatpush1.bf16.msra.mxu0 0
  %247 = vmatprep.subr.bf16.mxu0 0
  %248 = vmatpush1.bf16.msra.mxu0 0
  %249 = vmatprep.subr.bf16.mxu0 0
  %250 = vmatpush1.bf16.msra.mxu0 %v233
  %251 = vmatprep.subr.bf16.mxu0 0
  %252 = vmatpush1.bf16.msra.mxu0 %v232
  %253 = vmatprep.subr.bf16.mxu0 0
  %254 = vmatpush1.bf16.msra.mxu0 %v231
  %255 = vmatprep.subr.bf16.mxu0 0
  %256 = vmatpush1.bf16.msra.mxu0 %v230
  %257 = vmatprep.subr.bf16.mxu0 0
  %258 = vmatpush2.bf16.msra.mxu0 0
  %259 = vmatprep.subr.bf16.mxu0 0
  %260 = vmatpush2.bf16.msra.mxu0 0
  %261 = vmatprep.subr.bf16.mxu0 0
  %262 = vmatpush2.bf16.msra.mxu0 0
  %263 = vmatprep.subr.bf16.mxu0 0
  %264 = vmatpush2.bf16.msra.mxu0 0
  %265 = vmatprep.subr.bf16.mxu0 0
  %266 = vmatpush2.bf16.msra.mxu0 0
  %267 = vmatprep.subr.bf16.mxu0 0
  %268 = vmatpush2.bf16.msra.mxu0 0
  %269 = vmatprep.subr.bf16.mxu0 0
  %270 = vmatpush2.bf16.msra.mxu0 0
  %271 = vmatprep.subr.bf16.mxu0 0
  %272 = vmatpush2.bf16.msra.mxu0 0
  %273 = vmatprep.mubr.bf16.mxu0 0
  %274 = vmatmul.mubr.bf16.gmra.mxu0 %v239
  %v275 = vpop.f32.mrf.mxu0
  %v276 = vadd.f32 %v212, %v275
  %v277 = vpop.f32.mrf.mxu0
  %v278 = vpop.f32.mrf.mxu0
  %v279 = vpop.f32.mrf.mxu0
  %280 = vdwg.mxu0
  %v281 = vmax.f32 %v276, 0.0
  %v282 = vpack.c.bf16 %v281, %v281
  %v283 = vld [vmem:[%s4] sm:$0xf]
  %v284 = vld [vmem:[%s4 + $0x4] sm:$0xf]
  %v285 = vld [vmem:[%s4 + $0x8] sm:$0xf]
  %v286 = vld [vmem:[%s4 + $0xc] sm:$0xf]
  %v287 = vld [vmem:[%s4 + $0x10] sm:$0xf]
  %v288 = vld [vmem:[%s4 + $0x14] sm:$0xf]
  %v289 = vld [vmem:[%s4 + $0x18] sm:$0xf]
  %v290 = vld [vmem:[%s4 + $0x1c] sm:$0xf]
  %v291 = vld [vmem:[%s4 + $0x20] sm:$0xf]
  %v292 = vld [vmem:[%s4 + $0x24] sm:$0xf]
  %v293 = vld [vmem:[%s4 + $0x28] sm:$0xf]
  %v294 = vld [vmem:[%s4 + $0x2c] sm:$0xf]
  %v295 = vld [vmem:[%s4 + $0x30] sm:$0xf]
  %v296 = vld [vmem:[%s4 + $0x34] sm:$0xf]
  %v297 = vld [vmem:[%s4 + $0x38] sm:$0xf]
  %v298 = vld [vmem:[%s4 + $0x3c] sm:$0xf]
  %v299 = vlaneseq
  %v300 = vshrl.u32 %v299, 7
  %v301 = vsub.s32 0, %v300
  %v302 = vrot.slane %v89, %v301
  %v319 = vunpack.c.l.b16 %v283
  %v320 = vunpack.c.l.b16 %v284
  %v321 = vunpack.c.l.b16 %v285
  %v322 = vunpack.c.l.b16 %v286
  %v323 = vunpack.c.l.b16 %v287
  %v324 = vunpack.c.l.b16 %v288
  %v325 = vunpack.c.l.b16 %v289
  %v326 = vunpack.c.l.b16 %v290
  %v327 = vunpack.c.l.b16 %v291
  %v328 = vunpack.c.l.b16 %v292
  %v329 = vunpack.c.l.b16 %v293
  %v330 = vunpack.c.l.b16 %v294
  %v331 = vunpack.c.l.b16 %v295
  %v332 = vunpack.c.l.b16 %v296
  %v333 = vunpack.c.l.b16 %v297
  %v334 = vunpack.c.l.b16 %v298
  %v335 = vpack.c.b16 %v320, %v319
  %v336 = vpack.c.b16 %v322, %v321
  %v337 = vpack.c.b16 %v324, %v323
  %v338 = vpack.c.b16 %v326, %v325
  %v339 = vpack.c.b16 %v328, %v327
  %v340 = vpack.c.b16 %v330, %v329
  %v341 = vpack.c.b16 %v332, %v331
  %v342 = vpack.c.b16 %v334, %v333
  %351 = vmatprep.subr.bf16.mxu0 0
  %352 = vmatpush1.bf16.msra.mxu0 %v342
  %353 = vmatprep.subr.bf16.mxu0 0
  %354 = vmatpush1.bf16.msra.mxu0 %v341
  %355 = vmatprep.subr.bf16.mxu0 0
  %356 = vmatpush1.bf16.msra.mxu0 %v340
  %357 = vmatprep.subr.bf16.mxu0 0
  %358 = vmatpush1.bf16.msra.mxu0 %v339
  %359 = vmatprep.subr.bf16.mxu0 0
  %360 = vmatpush1.bf16.msra.mxu0 %v338
  %361 = vmatprep.subr.bf16.mxu0 0
  %362 = vmatpush1.bf16.msra.mxu0 %v337
  %363 = vmatprep.subr.bf16.mxu0 0
  %364 = vmatpush1.bf16.msra.mxu0 %v336
  %365 = vmatprep.subr.bf16.mxu0 0
  %366 = vmatpush1.bf16.msra.mxu0 %v335
  %367 = vmatprep.subr.bf16.mxu0 0
  %368 = vmatpush2.bf16.msra.mxu0 0
  %369 = vmatprep.subr.bf16.mxu0 0
  %370 = vmatpush2.bf16.msra.mxu0 0
  %371 = vmatprep.subr.bf16.mxu0 0
  %372 = vmatpush2.bf16.msra.mxu0 0
  %373 = vmatprep.subr.bf16.mxu0 0
  %374 = vmatpush2.bf16.msra.mxu0 0
  %375 = vmatprep.subr.bf16.mxu0 0
  %376 = vmatpush2.bf16.msra.mxu0 0
  %377 = vmatprep.subr.bf16.mxu0 0
  %378 = vmatpush2.bf16.msra.mxu0 0
  %379 = vmatprep.subr.bf16.mxu0 0
  %380 = vmatpush2.bf16.msra.mxu0 0
  %381 = vmatprep.subr.bf16.mxu0 0
  %382 = vmatpush2.bf16.msra.mxu0 0
  %383 = vmatprep.mubr.bf16.mxu0 0
  %384 = vmatmul.mubr.bf16.gmra.mxu0 %v282
  %v385 = vpop.f32.mrf.mxu0
  %v386 = vadd.f32 %v302, %v385
  %v387 = vpop.f32.mrf.mxu0
  %v388 = vpop.f32.mrf.mxu0
  %v389 = vpop.f32.mrf.mxu0
  %390 = vdwg.mxu0
  %v391 = vadd.f32 %v197, %v386
  %v392 = vsel %vm129, %v391, 0.0
  %393 = vadd.xlane.f32.xlu0 %v392
  %v394 = vpop.xlane.xlu0 %393
  %v395 = vmul.f32 %v394, %v177
  %v396 = vsub.f32 %v391, %v395
  %v397 = vmul.f32 %v396, %v396
  %v398 = vsel %vm129, %v397, 0.0
  %399 = vadd.xlane.f32.xlu0 %v398
  %v400 = vpop.xlane.xlu0 %399
  %v401 = vmul.f32 %v400, %v177
  %v402 = vadd.f32 %v401, 1e-05
  %v403 = vrsqrt.pop %v402
  %v404 = vmul.f32 %v396, %v403
  %v405 = vlaneseq
  %v406 = vshrl.u32 %v405, 7
  %v407 = vsub.s32 0, %v406
  %v408 = vrot.slane %v90, %v407
  %v409 = vmul.f32 %v404, %v408
  %v410 = vlaneseq
  %v411 = vshrl.u32 %v410, 7
  %v412 = vsub.s32 0, %v411
  %v413 = vrot.slane %v91, %v412
  %v414 = vadd.f32 %v409, %v413
  %s415 = scalar_lea.vmem %s6, 8
  %v416 = vld [vmem:[%s415] sm:$0x1]
  %v417 = vld [vmem:[%s415 + $0x1] sm:$0x1]
  %v418 = vld [vmem:[%s415 + $0x2] sm:$0x1]
  %v419 = vld [vmem:[%s415 + $0x3] sm:$0x1]
  %v420 = vld [vmem:[%s415 + $0x4] sm:$0x1]
  %v421 = vld [vmem:[%s415 + $0x5] sm:$0x1]
  %v422 = vpack.c.bf16 %v414, %v414
  %s423 = scalar_lea.vmem %s2, 32
  %v424 = vld [vmem:[%s423] sm:$0xf]
  %v425 = vld [vmem:[%s423 + $0x4] sm:$0xf]
  %v426 = vld [vmem:[%s423 + $0x8] sm:$0xf]
  %v427 = vld [vmem:[%s423 + $0xc] sm:$0xf]
  %v428 = vld [vmem:[%s423 + $0x10] sm:$0xf]
  %v429 = vld [vmem:[%s423 + $0x14] sm:$0xf]
  %v430 = vld [vmem:[%s423 + $0x18] sm:$0xf]
  %v431 = vld [vmem:[%s423 + $0x1c] sm:$0xf]
  %v432 = vlaneseq
  %v433 = vshrl.u32 %v432, 7
  %v434 = vsub.s32 0, %v433
  %v435 = vrot.slane %v416, %v434
  %v444 = vunpack.c.l.b16 %v424
  %v445 = vunpack.c.l.b16 %v425
  %v446 = vunpack.c.l.b16 %v426
  %v447 = vunpack.c.l.b16 %v427
  %v448 = vunpack.c.l.b16 %v428
  %v449 = vunpack.c.l.b16 %v429
  %v450 = vunpack.c.l.b16 %v430
  %v451 = vunpack.c.l.b16 %v431
  %v452 = vpack.c.b16 %v445, %v444
  %v453 = vpack.c.b16 %v447, %v446
  %v454 = vpack.c.b16 %v449, %v448
  %v455 = vpack.c.b16 %v451, %v450
  %v461 = vsel %vm129, %v422, 0
  %463 = vmatprep.subr.bf16.mxu0 0
  %464 = vmatpush1.bf16.msra.mxu0 0
  %465 = vmatprep.subr.bf16.mxu0 0
  %466 = vmatpush1.bf16.msra.mxu0 0
  %467 = vmatprep.subr.bf16.mxu0 0
  %468 = vmatpush1.bf16.msra.mxu0 0
  %469 = vmatprep.subr.bf16.mxu0 0
  %470 = vmatpush1.bf16.msra.mxu0 0
  %471 = vmatprep.subr.bf16.mxu0 0
  %472 = vmatpush1.bf16.msra.mxu0 %v455
  %473 = vmatprep.subr.bf16.mxu0 0
  %474 = vmatpush1.bf16.msra.mxu0 %v454
  %475 = vmatprep.subr.bf16.mxu0 0
  %476 = vmatpush1.bf16.msra.mxu0 %v453
  %477 = vmatprep.subr.bf16.mxu0 0
  %478 = vmatpush1.bf16.msra.mxu0 %v452
  %479 = vmatprep.subr.bf16.mxu0 0
  %480 = vmatpush2.bf16.msra.mxu0 0
  %481 = vmatprep.subr.bf16.mxu0 0
  %482 = vmatpush2.bf16.msra.mxu0 0
  %483 = vmatprep.subr.bf16.mxu0 0
  %484 = vmatpush2.bf16.msra.mxu0 0
  %485 = vmatprep.subr.bf16.mxu0 0
  %486 = vmatpush2.bf16.msra.mxu0 0
  %487 = vmatprep.subr.bf16.mxu0 0
  %488 = vmatpush2.bf16.msra.mxu0 0
  %489 = vmatprep.subr.bf16.mxu0 0
  %490 = vmatpush2.bf16.msra.mxu0 0
  %491 = vmatprep.subr.bf16.mxu0 0
  %492 = vmatpush2.bf16.msra.mxu0 0
  %493 = vmatprep.subr.bf16.mxu0 0
  %494 = vmatpush2.bf16.msra.mxu0 0
  %495 = vmatprep.mubr.bf16.mxu0 0
  %496 = vmatmul.mubr.bf16.gmra.mxu0 %v461
  %v497 = vpop.f32.mrf.mxu0
  %v498 = vadd.f32 %v435, %v497
  %v499 = vpop.f32.mrf.mxu0
  %v500 = vpop.f32.mrf.mxu0
  %v501 = vpop.f32.mrf.mxu0
  %502 = vdwg.mxu0
  %v503 = vadd.f32 %v414, %v498
  %v504 = vsel %vm129, %v503, 0.0
  %505 = vadd.xlane.f32.xlu0 %v504
  %v506 = vpop.xlane.xlu0 %505
  %v507 = vmul.f32 %v506, %v177
  %v508 = vsub.f32 %v503, %v507
  %v509 = vmul.f32 %v508, %v508
  %v510 = vsel %vm129, %v509, 0.0
  %511 = vadd.xlane.f32.xlu0 %v510
  %v512 = vpop.xlane.xlu0 %511
  %v513 = vmul.f32 %v512, %v177
  %v514 = vadd.f32 %v513, 1e-05
  %v515 = vrsqrt.pop %v514
  %v516 = vmul.f32 %v508, %v515
  %v517 = vlaneseq
  %v518 = vshrl.u32 %v517, 7
  %v519 = vsub.s32 0, %v518
  %v520 = vrot.slane %v417, %v519
  %v521 = vmul.f32 %v516, %v520
  %v522 = vlaneseq
  %v523 = vshrl.u32 %v522, 7
  %v524 = vsub.s32 0, %v523
  %v525 = vrot.slane %v418, %v524
  %v526 = vadd.f32 %v521, %v525
  %v527 = vpack.c.bf16 %v526, %v526
  %s528 = scalar_lea.vmem %s3, 32
  %v529 = vld [vmem:[%s528] sm:$0xf]
  %v530 = vld [vmem:[%s528 + $0x4] sm:$0xf]
  %v531 = vld [vmem:[%s528 + $0x8] sm:$0xf]
  %v532 = vld [vmem:[%s528 + $0xc] sm:$0xf]
  %v533 = vld [vmem:[%s528 + $0x10] sm:$0xf]
  %v534 = vld [vmem:[%s528 + $0x14] sm:$0xf]
  %v535 = vld [vmem:[%s528 + $0x18] sm:$0xf]
  %v536 = vld [vmem:[%s528 + $0x1c] sm:$0xf]
  %s537 = scalar_lea.vmem %s5, 1
  %v538 = vld [vmem:[%s537] sm:$0x1]
  %v540 = vlaneseq
  %v541 = vshrl.u32 %v540, 7
  %v542 = vsub.s32 0, %v541
  %v543 = vrot.slane %v538, %v542
  %v553 = vunpack.c.l.b16 %v529
  %v554 = vunpack.c.l.b16 %v530
  %v555 = vunpack.c.l.b16 %v531
  %v556 = vunpack.c.l.b16 %v532
  %v557 = vunpack.c.l.b16 %v533
  %v558 = vunpack.c.l.b16 %v534
  %v559 = vunpack.c.l.b16 %v535
  %v560 = vunpack.c.l.b16 %v536
  %v561 = vpack.c.b16 %v554, %v553
  %v562 = vpack.c.b16 %v556, %v555
  %v563 = vpack.c.b16 %v558, %v557
  %v564 = vpack.c.b16 %v560, %v559
  %v570 = vsel %vm129, %v527, 0
  %572 = vmatprep.subr.bf16.mxu0 0
  %573 = vmatpush1.bf16.msra.mxu0 0
  %574 = vmatprep.subr.bf16.mxu0 0
  %575 = vmatpush1.bf16.msra.mxu0 0
  %576 = vmatprep.subr.bf16.mxu0 0
  %577 = vmatpush1.bf16.msra.mxu0 0
  %578 = vmatprep.subr.bf16.mxu0 0
  %579 = vmatpush1.bf16.msra.mxu0 0
  %580 = vmatprep.subr.bf16.mxu0 0
  %581 = vmatpush1.bf16.msra.mxu0 %v564
  %582 = vmatprep.subr.bf16.mxu0 0
  %583 = vmatpush1.bf16.msra.mxu0 %v563
  %584 = vmatprep.subr.bf16.mxu0 0
  %585 = vmatpush1.bf16.msra.mxu0 %v562
  %586 = vmatprep.subr.bf16.mxu0 0
  %587 = vmatpush1.bf16.msra.mxu0 %v561
  %588 = vmatprep.subr.bf16.mxu0 0
  %589 = vmatpush2.bf16.msra.mxu0 0
  %590 = vmatprep.subr.bf16.mxu0 0
  %591 = vmatpush2.bf16.msra.mxu0 0
  %592 = vmatprep.subr.bf16.mxu0 0
  %593 = vmatpush2.bf16.msra.mxu0 0
  %594 = vmatprep.subr.bf16.mxu0 0
  %595 = vmatpush2.bf16.msra.mxu0 0
  %596 = vmatprep.subr.bf16.mxu0 0
  %597 = vmatpush2.bf16.msra.mxu0 0
  %598 = vmatprep.subr.bf16.mxu0 0
  %599 = vmatpush2.bf16.msra.mxu0 0
  %600 = vmatprep.subr.bf16.mxu0 0
  %601 = vmatpush2.bf16.msra.mxu0 0
  %602 = vmatprep.subr.bf16.mxu0 0
  %603 = vmatpush2.bf16.msra.mxu0 0
  %604 = vmatprep.mubr.bf16.mxu0 0
  %605 = vmatmul.mubr.bf16.gmra.mxu0 %v570
  %v606 = vpop.f32.mrf.mxu0
  %v607 = vadd.f32 %v543, %v606
  %v608 = vpop.f32.mrf.mxu0
  %v609 = vpop.f32.mrf.mxu0
  %v610 = vpop.f32.mrf.mxu0
  %611 = vdwg.mxu0
  %v612 = vmax.f32 %v607, 0.0
  %v613 = vpack.c.bf16 %v612, %v612
  %s614 = scalar_lea.vmem %s4, 64
  %v615 = vld [vmem:[%s614] sm:$0xf]
  %v616 = vld [vmem:[%s614 + $0x4] sm:$0xf]
  %v617 = vld [vmem:[%s614 + $0x8] sm:$0xf]
  %v618 = vld [vmem:[%s614 + $0xc] sm:$0xf]
  %v619 = vld [vmem:[%s614 + $0x10] sm:$0xf]
  %v620 = vld [vmem:[%s614 + $0x14] sm:$0xf]
  %v621 = vld [vmem:[%s614 + $0x18] sm:$0xf]
  %v622 = vld [vmem:[%s614 + $0x1c] sm:$0xf]
  %v623 = vld [vmem:[%s614 + $0x20] sm:$0xf]
  %v624 = vld [vmem:[%s614 + $0x24] sm:$0xf]
  %v625 = vld [vmem:[%s614 + $0x28] sm:$0xf]
  %v626 = vld [vmem:[%s614 + $0x2c] sm:$0xf]
  %v627 = vld [vmem:[%s614 + $0x30] sm:$0xf]
  %v628 = vld [vmem:[%s614 + $0x34] sm:$0xf]
  %v629 = vld [vmem:[%s614 + $0x38] sm:$0xf]
  %v630 = vld [vmem:[%s614 + $0x3c] sm:$0xf]
  %v631 = vlaneseq
  %v632 = vshrl.u32 %v631, 7
  %v633 = vsub.s32 0, %v632
  %v634 = vrot.slane %v419, %v633
  %v651 = vunpack.c.l.b16 %v615
  %v652 = vunpack.c.l.b16 %v616
  %v653 = vunpack.c.l.b16 %v617
  %v654 = vunpack.c.l.b16 %v618
  %v655 = vunpack.c.l.b16 %v619
  %v656 = vunpack.c.l.b16 %v620
  %v657 = vunpack.c.l.b16 %v621
  %v658 = vunpack.c.l.b16 %v622
  %v659 = vunpack.c.l.b16 %v623
  %v660 = vunpack.c.l.b16 %v624
  %v661 = vunpack.c.l.b16 %v625
  %v662 = vunpack.c.l.b16 %v626
  %v663 = vunpack.c.l.b16 %v627
  %v664 = vunpack.c.l.b16 %v628
  %v665 = vunpack.c.l.b16 %v629
  %v666 = vunpack.c.l.b16 %v630
  %v667 = vpack.c.b16 %v652, %v651
  %v668 = vpack.c.b16 %v654, %v653
  %v669 = vpack.c.b16 %v656, %v655
  %v670 = vpack.c.b16 %v658, %v657
  %v671 = vpack.c.b16 %v660, %v659
  %v672 = vpack.c.b16 %v662, %v661
  %v673 = vpack.c.b16 %v664, %v663
  %v674 = vpack.c.b16 %v666, %v665
  %683 = vmatprep.subr.bf16.mxu0 0
  %684 = vmatpush1.bf16.msra.mxu0 %v674
  %685 = vmatprep.subr.bf16.mxu0 0
  %686 = vmatpush1.bf16.msra.mxu0 %v673
  %687 = vmatprep.subr.bf16.mxu0 0
  %688 = vmatpush1.bf16.msra.mxu0 %v672
  %689 = vmatprep.subr.bf16.mxu0 0
  %690 = vmatpush1.bf16.msra.mxu0 %v671
  %691 = vmatprep.subr.bf16.mxu0 0
  %692 = vmatpush1.bf16.msra.mxu0 %v670
  %693 = vmatprep.subr.bf16.mxu0 0
  %694 = vmatpush1.bf16.msra.mxu0 %v669
  %695 = vmatprep.subr.bf16.mxu0 0
  %696 = vmatpush1.bf16.msra.mxu0 %v668
  %697 = vmatprep.subr.bf16.mxu0 0
  %698 = vmatpush1.bf16.msra.mxu0 %v667
  %699 = vmatprep.subr.bf16.mxu0 0
  %700 = vmatpush2.bf16.msra.mxu0 0
  %701 = vmatprep.subr.bf16.mxu0 0
  %702 = vmatpush2.bf16.msra.mxu0 0
  %703 = vmatprep.subr.bf16.mxu0 0
  %704 = vmatpush2.bf16.msra.mxu0 0
  %705 = vmatprep.subr.bf16.mxu0 0
  %706 = vmatpush2.bf16.msra.mxu0 0
  %707 = vmatprep.subr.bf16.mxu0 0
  %708 = vmatpush2.bf16.msra.mxu0 0
  %709 = vmatprep.subr.bf16.mxu0 0
  %710 = vmatpush2.bf16.msra.mxu0 0
  %711 = vmatprep.subr.bf16.mxu0 0
  %712 = vmatpush2.bf16.msra.mxu0 0
  %713 = vmatprep.subr.bf16.mxu0 0
  %714 = vmatpush2.bf16.msra.mxu0 0
  %715 = vmatprep.mubr.bf16.mxu0 0
  %716 = vmatmul.mubr.bf16.gmra.mxu0 %v613
  %v717 = vpop.f32.mrf.mxu0
  %v718 = vadd.f32 %v634, %v717
  %v719 = vpop.f32.mrf.mxu0
  %v720 = vpop.f32.mrf.mxu0
  %v721 = vpop.f32.mrf.mxu0
  %722 = vdwg.mxu0
  %v723 = vadd.f32 %v526, %v718
  %v724 = vsel %vm129, %v723, 0.0
  %725 = vadd.xlane.f32.xlu0 %v724
  %v726 = vpop.xlane.xlu0 %725
  %v727 = vmul.f32 %v726, %v177
  %v728 = vsub.f32 %v723, %v727
  %v729 = vmul.f32 %v728, %v728
  %v730 = vsel %vm129, %v729, 0.0
  %731 = vadd.xlane.f32.xlu0 %v730
  %v732 = vpop.xlane.xlu0 %731
  %v733 = vmul.f32 %v732, %v177
  %v734 = vadd.f32 %v733, 1e-05
  %v735 = vrsqrt.pop %v734
  %v736 = vmul.f32 %v728, %v735
  %v737 = vlaneseq
  %v738 = vshrl.u32 %v737, 7
  %v739 = vsub.s32 0, %v738
  %v740 = vrot.slane %v420, %v739
  %v741 = vmul.f32 %v736, %v740
  %v742 = vlaneseq
  %v743 = vshrl.u32 %v742, 7
  %v744 = vsub.s32 0, %v743
  %v745 = vrot.slane %v421, %v744
  %v746 = vadd.f32 %v741, %v745
  %s747 = scalar_lea.vmem %s6, 16
  %v748 = vld [vmem:[%s747] sm:$0x1]
  %v749 = vld [vmem:[%s747 + $0x1] sm:$0x1]
  %v750 = vld [vmem:[%s747 + $0x2] sm:$0x1]
  %v751 = vld [vmem:[%s747 + $0x3] sm:$0x1]
  %v752 = vld [vmem:[%s747 + $0x4] sm:$0x1]
  %v753 = vld [vmem:[%s747 + $0x5] sm:$0x1]
  %v754 = vpack.c.bf16 %v746, %v746
  %s755 = scalar_lea.vmem %s2, 64
  %v756 = vld [vmem:[%s755] sm:$0xf]
  %v757 = vld [vmem:[%s755 + $0x4] sm:$0xf]
  %v758 = vld [vmem:[%s755 + $0x8] sm:$0xf]
  %v759 = vld [vmem:[%s755 + $0xc] sm:$0xf]
  %v760 = vld [vmem:[%s755 + $0x10] sm:$0xf]
  %v761 = vld [vmem:[%s755 + $0x14] sm:$0xf]
  %v762 = vld [vmem:[%s755 + $0x18] sm:$0xf]
  %v763 = vld [vmem:[%s755 + $0x1c] sm:$0xf]
  %v764 = vlaneseq
  %v765 = vshrl.u32 %v764, 7
  %v766 = vsub.s32 0, %v765
  %v767 = vrot.slane %v748, %v766
  %v776 = vunpack.c.l.b16 %v756
  %v777 = vunpack.c.l.b16 %v757
  %v778 = vunpack.c.l.b16 %v758
  %v779 = vunpack.c.l.b16 %v759
  %v780 = vunpack.c.l.b16 %v760
  %v781 = vunpack.c.l.b16 %v761
  %v782 = vunpack.c.l.b16 %v762
  %v783 = vunpack.c.l.b16 %v763
  %v784 = vpack.c.b16 %v777, %v776
  %v785 = vpack.c.b16 %v779, %v778
  %v786 = vpack.c.b16 %v781, %v780
  %v787 = vpack.c.b16 %v783, %v782
  %v793 = vsel %vm129, %v754, 0
  %795 = vmatprep.subr.bf16.mxu0 0
  %796 = vmatpush1.bf16.msra.mxu0 0
  %797 = vmatprep.subr.bf16.mxu0 0
  %798 = vmatpush1.bf16.msra.mxu0 0
  %799 = vmatprep.subr.bf16.mxu0 0
  %800 = vmatpush1.bf16.msra.mxu0 0
  %801 = vmatprep.subr.bf16.mxu0 0
  %802 = vmatpush1.bf16.msra.mxu0 0
  %803 = vmatprep.subr.bf16.mxu0 0
  %804 = vmatpush1.bf16.msra.mxu0 %v787
  %805 = vmatprep.subr.bf16.mxu0 0
  %806 = vmatpush1.bf16.msra.mxu0 %v786
  %807 = vmatprep.subr.bf16.mxu0 0
  %808 = vmatpush1.bf16.msra.mxu0 %v785
  %809 = vmatprep.subr.bf16.mxu0 0
  %810 = vmatpush1.bf16.msra.mxu0 %v784
  %811 = vmatprep.subr.bf16.mxu0 0
  %812 = vmatpush2.bf16.msra.mxu0 0
  %813 = vmatprep.subr.bf16.mxu0 0
  %814 = vmatpush2.bf16.msra.mxu0 0
  %815 = vmatprep.subr.bf16.mxu0 0
  %816 = vmatpush2.bf16.msra.mxu0 0
  %817 = vmatprep.subr.bf16.mxu0 0
  %818 = vmatpush2.bf16.msra.mxu0 0
  %819 = vmatprep.subr.bf16.mxu0 0
  %820 = vmatpush2.bf16.msra.mxu0 0
  %821 = vmatprep.subr.bf16.mxu0 0
  %822 = vmatpush2.bf16.msra.mxu0 0
  %823 = vmatprep.subr.bf16.mxu0 0
  %824 = vmatpush2.bf16.msra.mxu0 0
  %825 = vmatprep.subr.bf16.mxu0 0
  %826 = vmatpush2.bf16.msra.mxu0 0
  %827 = vmatprep.mubr.bf16.mxu0 0
  %828 = vmatmul.mubr.bf16.gmra.mxu0 %v793
  %v829 = vpop.f32.mrf.mxu0
  %v830 = vadd.f32 %v767, %v829
  %v831 = vpop.f32.mrf.mxu0
  %v832 = vpop.f32.mrf.mxu0
  %v833 = vpop.f32.mrf.mxu0
  %834 = vdwg.mxu0
  %v835 = vadd.f32 %v746, %v830
  %v836 = vsel %vm129, %v835, 0.0
  %837 = vadd.xlane.f32.xlu0 %v836
  %v838 = vpop.xlane.xlu0 %837
  %v839 = vmul.f32 %v838, %v177
  %v840 = vsub.f32 %v835, %v839
  %v841 = vmul.f32 %v840, %v840
  %v842 = vsel %vm129, %v841, 0.0
  %843 = vadd.xlane.f32.xlu0 %v842
  %v844 = vpop.xlane.xlu0 %843
  %v845 = vmul.f32 %v844, %v177
  %v846 = vadd.f32 %v845, 1e-05
  %v847 = vrsqrt.pop %v846
  %v848 = vmul.f32 %v840, %v847
  %v849 = vlaneseq
  %v850 = vshrl.u32 %v849, 7
  %v851 = vsub.s32 0, %v850
  %v852 = vrot.slane %v749, %v851
  %v853 = vmul.f32 %v848, %v852
  %v854 = vlaneseq
  %v855 = vshrl.u32 %v854, 7
  %v856 = vsub.s32 0, %v855
  %v857 = vrot.slane %v750, %v856
  %v858 = vadd.f32 %v853, %v857
  %v859 = vpack.c.bf16 %v858, %v858
  %s860 = scalar_lea.vmem %s3, 64
  %v861 = vld [vmem:[%s860] sm:$0xf]
  %v862 = vld [vmem:[%s860 + $0x4] sm:$0xf]
  %v863 = vld [vmem:[%s860 + $0x8] sm:$0xf]
  %v864 = vld [vmem:[%s860 + $0xc] sm:$0xf]
  %v865 = vld [vmem:[%s860 + $0x10] sm:$0xf]
  %v866 = vld [vmem:[%s860 + $0x14] sm:$0xf]
  %v867 = vld [vmem:[%s860 + $0x18] sm:$0xf]
  %v868 = vld [vmem:[%s860 + $0x1c] sm:$0xf]
  %s869 = scalar_lea.vmem %s5, 2
  %v870 = vld [vmem:[%s869] sm:$0x1]
  %v872 = vlaneseq
  %v873 = vshrl.u32 %v872, 7
  %v874 = vsub.s32 0, %v873
  %v875 = vrot.slane %v870, %v874
  %v885 = vunpack.c.l.b16 %v861
  %v886 = vunpack.c.l.b16 %v862
  %v887 = vunpack.c.l.b16 %v863
  %v888 = vunpack.c.l.b16 %v864
  %v889 = vunpack.c.l.b16 %v865
  %v890 = vunpack.c.l.b16 %v866
  %v891 = vunpack.c.l.b16 %v867
  %v892 = vunpack.c.l.b16 %v868
  %v893 = vpack.c.b16 %v886, %v885
  %v894 = vpack.c.b16 %v888, %v887
  %v895 = vpack.c.b16 %v890, %v889
  %v896 = vpack.c.b16 %v892, %v891
  %v902 = vsel %vm129, %v859, 0
  %904 = vmatprep.subr.bf16.mxu0 0
  %905 = vmatpush1.bf16.msra.mxu0 0
  %906 = vmatprep.subr.bf16.mxu0 0
  %907 = vmatpush1.bf16.msra.mxu0 0
  %908 = vmatprep.subr.bf16.mxu0 0
  %909 = vmatpush1.bf16.msra.mxu0 0
  %910 = vmatprep.subr.bf16.mxu0 0
  %911 = vmatpush1.bf16.msra.mxu0 0
  %912 = vmatprep.subr.bf16.mxu0 0
  %913 = vmatpush1.bf16.msra.mxu0 %v896
  %914 = vmatprep.subr.bf16.mxu0 0
  %915 = vmatpush1.bf16.msra.mxu0 %v895
  %916 = vmatprep.subr.bf16.mxu0 0
  %917 = vmatpush1.bf16.msra.mxu0 %v894
  %918 = vmatprep.subr.bf16.mxu0 0
  %919 = vmatpush1.bf16.msra.mxu0 %v893
  %920 = vmatprep.subr.bf16.mxu0 0
  %921 = vmatpush2.bf16.msra.mxu0 0
  %922 = vmatprep.subr.bf16.mxu0 0
  %923 = vmatpush2.bf16.msra.mxu0 0
  %924 = vmatprep.subr.bf16.mxu0 0
  %925 = vmatpush2.bf16.msra.mxu0 0
  %926 = vmatprep.subr.bf16.mxu0 0
  %927 = vmatpush2.bf16.msra.mxu0 0
  %928 = vmatprep.subr.bf16.mxu0 0
  %929 = vmatpush2.bf16.msra.mxu0 0
  %930 = vmatprep.subr.bf16.mxu0 0
  %931 = vmatpush2.bf16.msra.mxu0 0
  %932 = vmatprep.subr.bf16.mxu0 0
  %933 = vmatpush2.bf16.msra.mxu0 0
  %934 = vmatprep.subr.bf16.mxu0 0
  %935 = vmatpush2.bf16.msra.mxu0 0
  %936 = vmatprep.mubr.bf16.mxu0 0
  %937 = vmatmul.mubr.bf16.gmra.mxu0 %v902
  %v938 = vpop.f32.mrf.mxu0
  %v939 = vadd.f32 %v875, %v938
  %v940 = vpop.f32.mrf.mxu0
  %v941 = vpop.f32.mrf.mxu0
  %v942 = vpop.f32.mrf.mxu0
  %943 = vdwg.mxu0
  %v944 = vmax.f32 %v939, 0.0
  %v945 = vpack.c.bf16 %v944, %v944
  %s946 = scalar_lea.vmem %s4, 128
  %v947 = vld [vmem:[%s946] sm:$0xf]
  %v948 = vld [vmem:[%s946 + $0x4] sm:$0xf]
  %v949 = vld [vmem:[%s946 + $0x8] sm:$0xf]
  %v950 = vld [vmem:[%s946 + $0xc] sm:$0xf]
  %v951 = vld [vmem:[%s946 + $0x10] sm:$0xf]
  %v952 = vld [vmem:[%s946 + $0x14] sm:$0xf]
  %v953 = vld [vmem:[%s946 + $0x18] sm:$0xf]
  %v954 = vld [vmem:[%s946 + $0x1c] sm:$0xf]
  %v955 = vld [vmem:[%s946 + $0x20] sm:$0xf]
  %v956 = vld [vmem:[%s946 + $0x24] sm:$0xf]
  %v957 = vld [vmem:[%s946 + $0x28] sm:$0xf]
  %v958 = vld [vmem:[%s946 + $0x2c] sm:$0xf]
  %v959 = vld [vmem:[%s946 + $0x30] sm:$0xf]
  %v960 = vld [vmem:[%s946 + $0x34] sm:$0xf]
  %v961 = vld [vmem:[%s946 + $0x38] sm:$0xf]
  %v962 = vld [vmem:[%s946 + $0x3c] sm:$0xf]
  %v963 = vlaneseq
  %v964 = vshrl.u32 %v963, 7
  %v965 = vsub.s32 0, %v964
  %v966 = vrot.slane %v751, %v965
  %v983 = vunpack.c.l.b16 %v947
  %v984 = vunpack.c.l.b16 %v948
  %v985 = vunpack.c.l.b16 %v949
  %v986 = vunpack.c.l.b16 %v950
  %v987 = vunpack.c.l.b16 %v951
  %v988 = vunpack.c.l.b16 %v952
  %v989 = vunpack.c.l.b16 %v953
  %v990 = vunpack.c.l.b16 %v954
  %v991 = vunpack.c.l.b16 %v955
  %v992 = vunpack.c.l.b16 %v956
  %v993 = vunpack.c.l.b16 %v957
  %v994 = vunpack.c.l.b16 %v958
  %v995 = vunpack.c.l.b16 %v959
  %v996 = vunpack.c.l.b16 %v960
  %v997 = vunpack.c.l.b16 %v961
  %v998 = vunpack.c.l.b16 %v962
  %v999 = vpack.c.b16 %v984, %v983
  %v1000 = vpack.c.b16 %v986, %v985
  %v1001 = vpack.c.b16 %v988, %v987
  %v1002 = vpack.c.b16 %v990, %v989
  %v1003 = vpack.c.b16 %v992, %v991
  %v1004 = vpack.c.b16 %v994, %v993
  %v1005 = vpack.c.b16 %v996, %v995
  %v1006 = vpack.c.b16 %v998, %v997
  %1015 = vmatprep.subr.bf16.mxu0 0
  %1016 = vmatpush1.bf16.msra.mxu0 %v1006
  %1017 = vmatprep.subr.bf16.mxu0 0
  %1018 = vmatpush1.bf16.msra.mxu0 %v1005
  %1019 = vmatprep.subr.bf16.mxu0 0
  %1020 = vmatpush1.bf16.msra.mxu0 %v1004
  %1021 = vmatprep.subr.bf16.mxu0 0
  %1022 = vmatpush1.bf16.msra.mxu0 %v1003
  %1023 = vmatprep.subr.bf16.mxu0 0
  %1024 = vmatpush1.bf16.msra.mxu0 %v1002
  %1025 = vmatprep.subr.bf16.mxu0 0
  %1026 = vmatpush1.bf16.msra.mxu0 %v1001
  %1027 = vmatprep.subr.bf16.mxu0 0
  %1028 = vmatpush1.bf16.msra.mxu0 %v1000
  %1029 = vmatprep.subr.bf16.mxu0 0
  %1030 = vmatpush1.bf16.msra.mxu0 %v999
  %1031 = vmatprep.subr.bf16.mxu0 0
  %1032 = vmatpush2.bf16.msra.mxu0 0
  %1033 = vmatprep.subr.bf16.mxu0 0
  %1034 = vmatpush2.bf16.msra.mxu0 0
  %1035 = vmatprep.subr.bf16.mxu0 0
  %1036 = vmatpush2.bf16.msra.mxu0 0
  %1037 = vmatprep.subr.bf16.mxu0 0
  %1038 = vmatpush2.bf16.msra.mxu0 0
  %1039 = vmatprep.subr.bf16.mxu0 0
  %1040 = vmatpush2.bf16.msra.mxu0 0
  %1041 = vmatprep.subr.bf16.mxu0 0
  %1042 = vmatpush2.bf16.msra.mxu0 0
  %1043 = vmatprep.subr.bf16.mxu0 0
  %1044 = vmatpush2.bf16.msra.mxu0 0
  %1045 = vmatprep.subr.bf16.mxu0 0
  %1046 = vmatpush2.bf16.msra.mxu0 0
  %1047 = vmatprep.mubr.bf16.mxu0 0
  %1048 = vmatmul.mubr.bf16.gmra.mxu0 %v945
  %v1049 = vpop.f32.mrf.mxu0
  %v1050 = vadd.f32 %v966, %v1049
  %v1051 = vpop.f32.mrf.mxu0
  %v1052 = vpop.f32.mrf.mxu0
  %v1053 = vpop.f32.mrf.mxu0
  %1054 = vdwg.mxu0
  %v1055 = vadd.f32 %v858, %v1050
  %v1056 = vsel %vm129, %v1055, 0.0
  %1057 = vadd.xlane.f32.xlu0 %v1056
  %v1058 = vpop.xlane.xlu0 %1057
  %v1059 = vmul.f32 %v1058, %v177
  %v1060 = vsub.f32 %v1055, %v1059
  %v1061 = vmul.f32 %v1060, %v1060
  %v1062 = vsel %vm129, %v1061, 0.0
  %1063 = vadd.xlane.f32.xlu0 %v1062
  %v1064 = vpop.xlane.xlu0 %1063
  %v1065 = vmul.f32 %v1064, %v177
  %v1066 = vadd.f32 %v1065, 1e-05
  %v1067 = vrsqrt.pop %v1066
  %v1068 = vmul.f32 %v1060, %v1067
  %v1069 = vlaneseq
  %v1070 = vshrl.u32 %v1069, 7
  %v1071 = vsub.s32 0, %v1070
  %v1072 = vrot.slane %v752, %v1071
  %v1073 = vmul.f32 %v1068, %v1072
  %v1074 = vlaneseq
  %v1075 = vshrl.u32 %v1074, 7
  %v1076 = vsub.s32 0, %v1075
  %v1077 = vrot.slane %v753, %v1076
  %v1078 = vadd.f32 %v1073, %v1077
  %s1079 = scalar_lea.vmem %s6, 24
  %v1080 = vld [vmem:[%s1079] sm:$0x1]
  %v1081 = vld [vmem:[%s1079 + $0x1] sm:$0x1]
  %v1082 = vld [vmem:[%s1079 + $0x2] sm:$0x1]
  %v1083 = vld [vmem:[%s1079 + $0x3] sm:$0x1]
  %v1084 = vld [vmem:[%s1079 + $0x4] sm:$0x1]
  %v1085 = vld [vmem:[%s1079 + $0x5] sm:$0x1]
  %v1086 = vpack.c.bf16 %v1078, %v1078
  %s1087 = scalar_lea.vmem %s2, 96
  %v1088 = vld [vmem:[%s1087] sm:$0xf]
  %v1089 = vld [vmem:[%s1087 + $0x4] sm:$0xf]
  %v1090 = vld [vmem:[%s1087 + $0x8] sm:$0xf]
  %v1091 = vld [vmem:[%s1087 + $0xc] sm:$0xf]
  %v1092 = vld [vmem:[%s1087 + $0x10] sm:$0xf]
  %v1093 = vld [vmem:[%s1087 + $0x14] sm:$0xf]
  %v1094 = vld [vmem:[%s1087 + $0x18] sm:$0xf]
  %v1095 = vld [vmem:[%s1087 + $0x1c] sm:$0xf]
  %v1096 = vlaneseq
  %v1097 = vshrl.u32 %v1096, 7
  %v1098 = vsub.s32 0, %v1097
  %v1099 = vrot.slane %v1080, %v1098
  %v1108 = vunpack.c.l.b16 %v1088
  %v1109 = vunpack.c.l.b16 %v1089
  %v1110 = vunpack.c.l.b16 %v1090
  %v1111 = vunpack.c.l.b16 %v1091
  %v1112 = vunpack.c.l.b16 %v1092
  %v1113 = vunpack.c.l.b16 %v1093
  %v1114 = vunpack.c.l.b16 %v1094
  %v1115 = vunpack.c.l.b16 %v1095
  %v1116 = vpack.c.b16 %v1109, %v1108
  %v1117 = vpack.c.b16 %v1111, %v1110
  %v1118 = vpack.c.b16 %v1113, %v1112
  %v1119 = vpack.c.b16 %v1115, %v1114
  %v1125 = vsel %vm129, %v1086, 0
  %1127 = vmatprep.subr.bf16.mxu0 0
  %1128 = vmatpush1.bf16.msra.mxu0 0
  %1129 = vmatprep.subr.bf16.mxu0 0
  %1130 = vmatpush1.bf16.msra.mxu0 0
  %1131 = vmatprep.subr.bf16.mxu0 0
  %1132 = vmatpush1.bf16.msra.mxu0 0
  %1133 = vmatprep.subr.bf16.mxu0 0
  %1134 = vmatpush1.bf16.msra.mxu0 0
  %1135 = vmatprep.subr.bf16.mxu0 0
  %1136 = vmatpush1.bf16.msra.mxu0 %v1119
  %1137 = vmatprep.subr.bf16.mxu0 0
  %1138 = vmatpush1.bf16.msra.mxu0 %v1118
  %1139 = vmatprep.subr.bf16.mxu0 0
  %1140 = vmatpush1.bf16.msra.mxu0 %v1117
  %1141 = vmatprep.subr.bf16.mxu0 0
  %1142 = vmatpush1.bf16.msra.mxu0 %v1116
  %1143 = vmatprep.subr.bf16.mxu0 0
  %1144 = vmatpush2.bf16.msra.mxu0 0
  %1145 = vmatprep.subr.bf16.mxu0 0
  %1146 = vmatpush2.bf16.msra.mxu0 0
  %1147 = vmatprep.subr.bf16.mxu0 0
  %1148 = vmatpush2.bf16.msra.mxu0 0
  %1149 = vmatprep.subr.bf16.mxu0 0
  %1150 = vmatpush2.bf16.msra.mxu0 0
  %1151 = vmatprep.subr.bf16.mxu0 0
  %1152 = vmatpush2.bf16.msra.mxu0 0
  %1153 = vmatprep.subr.bf16.mxu0 0
  %1154 = vmatpush2.bf16.msra.mxu0 0
  %1155 = vmatprep.subr.bf16.mxu0 0
  %1156 = vmatpush2.bf16.msra.mxu0 0
  %1157 = vmatprep.subr.bf16.mxu0 0
  %1158 = vmatpush2.bf16.msra.mxu0 0
  %1159 = vmatprep.mubr.bf16.mxu0 0
  %1160 = vmatmul.mubr.bf16.gmra.mxu0 %v1125
  %v1161 = vpop.f32.mrf.mxu0
  %v1162 = vadd.f32 %v1099, %v1161
  %v1163 = vpop.f32.mrf.mxu0
  %v1164 = vpop.f32.mrf.mxu0
  %v1165 = vpop.f32.mrf.mxu0
  %1166 = vdwg.mxu0
  %v1167 = vadd.f32 %v1078, %v1162
  %v1168 = vsel %vm129, %v1167, 0.0
  %1169 = vadd.xlane.f32.xlu0 %v1168
  %v1170 = vpop.xlane.xlu0 %1169
  %v1171 = vmul.f32 %v1170, %v177
  %v1172 = vsub.f32 %v1167, %v1171
  %v1173 = vmul.f32 %v1172, %v1172
  %v1174 = vsel %vm129, %v1173, 0.0
  %1175 = vadd.xlane.f32.xlu0 %v1174
  %v1176 = vpop.xlane.xlu0 %1175
  %v1177 = vmul.f32 %v1176, %v177
  %v1178 = vadd.f32 %v1177, 1e-05
  %v1179 = vrsqrt.pop %v1178
  %v1180 = vmul.f32 %v1172, %v1179
  %v1181 = vlaneseq
  %v1182 = vshrl.u32 %v1181, 7
  %v1183 = vsub.s32 0, %v1182
  %v1184 = vrot.slane %v1081, %v1183
  %v1185 = vmul.f32 %v1180, %v1184
  %v1186 = vlaneseq
  %v1187 = vshrl.u32 %v1186, 7
  %v1188 = vsub.s32 0, %v1187
  %v1189 = vrot.slane %v1082, %v1188
  %v1190 = vadd.f32 %v1185, %v1189
  %v1191 = vpack.c.bf16 %v1190, %v1190
  %s1192 = scalar_lea.vmem %s3, 96
  %v1193 = vld [vmem:[%s1192] sm:$0xf]
  %v1194 = vld [vmem:[%s1192 + $0x4] sm:$0xf]
  %v1195 = vld [vmem:[%s1192 + $0x8] sm:$0xf]
  %v1196 = vld [vmem:[%s1192 + $0xc] sm:$0xf]
  %v1197 = vld [vmem:[%s1192 + $0x10] sm:$0xf]
  %v1198 = vld [vmem:[%s1192 + $0x14] sm:$0xf]
  %v1199 = vld [vmem:[%s1192 + $0x18] sm:$0xf]
  %v1200 = vld [vmem:[%s1192 + $0x1c] sm:$0xf]
  %s1201 = scalar_lea.vmem %s5, 3
  %v1202 = vld [vmem:[%s1201] sm:$0x1]
  %v1204 = vlaneseq
  %v1205 = vshrl.u32 %v1204, 7
  %v1206 = vsub.s32 0, %v1205
  %v1207 = vrot.slane %v1202, %v1206
  %v1217 = vunpack.c.l.b16 %v1193
  %v1218 = vunpack.c.l.b16 %v1194
  %v1219 = vunpack.c.l.b16 %v1195
  %v1220 = vunpack.c.l.b16 %v1196
  %v1221 = vunpack.c.l.b16 %v1197
  %v1222 = vunpack.c.l.b16 %v1198
  %v1223 = vunpack.c.l.b16 %v1199
  %v1224 = vunpack.c.l.b16 %v1200
  %v1225 = vpack.c.b16 %v1218, %v1217
  %v1226 = vpack.c.b16 %v1220, %v1219
  %v1227 = vpack.c.b16 %v1222, %v1221
  %v1228 = vpack.c.b16 %v1224, %v1223
  %v1234 = vsel %vm129, %v1191, 0
  %1236 = vmatprep.subr.bf16.mxu0 0
  %1237 = vmatpush1.bf16.msra.mxu0 0
  %1238 = vmatprep.subr.bf16.mxu0 0
  %1239 = vmatpush1.bf16.msra.mxu0 0
  %1240 = vmatprep.subr.bf16.mxu0 0
  %1241 = vmatpush1.bf16.msra.mxu0 0
  %1242 = vmatprep.subr.bf16.mxu0 0
  %1243 = vmatpush1.bf16.msra.mxu0 0
  %1244 = vmatprep.subr.bf16.mxu0 0
  %1245 = vmatpush1.bf16.msra.mxu0 %v1228
  %1246 = vmatprep.subr.bf16.mxu0 0
  %1247 = vmatpush1.bf16.msra.mxu0 %v1227
  %1248 = vmatprep.subr.bf16.mxu0 0
  %1249 = vmatpush1.bf16.msra.mxu0 %v1226
  %1250 = vmatprep.subr.bf16.mxu0 0
  %1251 = vmatpush1.bf16.msra.mxu0 %v1225
  %1252 = vmatprep.subr.bf16.mxu0 0
  %1253 = vmatpush2.bf16.msra.mxu0 0
  %1254 = vmatprep.subr.bf16.mxu0 0
  %1255 = vmatpush2.bf16.msra.mxu0 0
  %1256 = vmatprep.subr.bf16.mxu0 0
  %1257 = vmatpush2.bf16.msra.mxu0 0
  %1258 = vmatprep.subr.bf16.mxu0 0
  %1259 = vmatpush2.bf16.msra.mxu0 0
  %1260 = vmatprep.subr.bf16.mxu0 0
  %1261 = vmatpush2.bf16.msra.mxu0 0
  %1262 = vmatprep.subr.bf16.mxu0 0
  %1263 = vmatpush2.bf16.msra.mxu0 0
  %1264 = vmatprep.subr.bf16.mxu0 0
  %1265 = vmatpush2.bf16.msra.mxu0 0
  %1266 = vmatprep.subr.bf16.mxu0 0
  %1267 = vmatpush2.bf16.msra.mxu0 0
  %1268 = vmatprep.mubr.bf16.mxu0 0
  %1269 = vmatmul.mubr.bf16.gmra.mxu0 %v1234
  %v1270 = vpop.f32.mrf.mxu0
  %v1271 = vadd.f32 %v1207, %v1270
  %v1272 = vpop.f32.mrf.mxu0
  %v1273 = vpop.f32.mrf.mxu0
  %v1274 = vpop.f32.mrf.mxu0
  %1275 = vdwg.mxu0
  %v1276 = vmax.f32 %v1271, 0.0
  %v1277 = vpack.c.bf16 %v1276, %v1276
  %s1278 = scalar_lea.vmem %s4, 192
  %v1279 = vld [vmem:[%s1278] sm:$0xf]
  %v1280 = vld [vmem:[%s1278 + $0x4] sm:$0xf]
  %v1281 = vld [vmem:[%s1278 + $0x8] sm:$0xf]
  %v1282 = vld [vmem:[%s1278 + $0xc] sm:$0xf]
  %v1283 = vld [vmem:[%s1278 + $0x10] sm:$0xf]
  %v1284 = vld [vmem:[%s1278 + $0x14] sm:$0xf]
  %v1285 = vld [vmem:[%s1278 + $0x18] sm:$0xf]
  %v1286 = vld [vmem:[%s1278 + $0x1c] sm:$0xf]
  %v1287 = vld [vmem:[%s1278 + $0x20] sm:$0xf]
  %v1288 = vld [vmem:[%s1278 + $0x24] sm:$0xf]
  %v1289 = vld [vmem:[%s1278 + $0x28] sm:$0xf]
  %v1290 = vld [vmem:[%s1278 + $0x2c] sm:$0xf]
  %v1291 = vld [vmem:[%s1278 + $0x30] sm:$0xf]
  %v1292 = vld [vmem:[%s1278 + $0x34] sm:$0xf]
  %v1293 = vld [vmem:[%s1278 + $0x38] sm:$0xf]
  %v1294 = vld [vmem:[%s1278 + $0x3c] sm:$0xf]
  %v1295 = vlaneseq
  %v1296 = vshrl.u32 %v1295, 7
  %v1297 = vsub.s32 0, %v1296
  %v1298 = vrot.slane %v1083, %v1297
  %v1315 = vunpack.c.l.b16 %v1279
  %v1316 = vunpack.c.l.b16 %v1280
  %v1317 = vunpack.c.l.b16 %v1281
  %v1318 = vunpack.c.l.b16 %v1282
  %v1319 = vunpack.c.l.b16 %v1283
  %v1320 = vunpack.c.l.b16 %v1284
  %v1321 = vunpack.c.l.b16 %v1285
  %v1322 = vunpack.c.l.b16 %v1286
  %v1323 = vunpack.c.l.b16 %v1287
  %v1324 = vunpack.c.l.b16 %v1288
  %v1325 = vunpack.c.l.b16 %v1289
  %v1326 = vunpack.c.l.b16 %v1290
  %v1327 = vunpack.c.l.b16 %v1291
  %v1328 = vunpack.c.l.b16 %v1292
  %v1329 = vunpack.c.l.b16 %v1293
  %v1330 = vunpack.c.l.b16 %v1294
  %v1331 = vpack.c.b16 %v1316, %v1315
  %v1332 = vpack.c.b16 %v1318, %v1317
  %v1333 = vpack.c.b16 %v1320, %v1319
  %v1334 = vpack.c.b16 %v1322, %v1321
  %v1335 = vpack.c.b16 %v1324, %v1323
  %v1336 = vpack.c.b16 %v1326, %v1325
  %v1337 = vpack.c.b16 %v1328, %v1327
  %v1338 = vpack.c.b16 %v1330, %v1329
  %1347 = vmatprep.subr.bf16.mxu0 0
  %1348 = vmatpush1.bf16.msra.mxu0 %v1338
  %1349 = vmatprep.subr.bf16.mxu0 0
  %1350 = vmatpush1.bf16.msra.mxu0 %v1337
  %1351 = vmatprep.subr.bf16.mxu0 0
  %1352 = vmatpush1.bf16.msra.mxu0 %v1336
  %1353 = vmatprep.subr.bf16.mxu0 0
  %1354 = vmatpush1.bf16.msra.mxu0 %v1335
  %1355 = vmatprep.subr.bf16.mxu0 0
  %1356 = vmatpush1.bf16.msra.mxu0 %v1334
  %1357 = vmatprep.subr.bf16.mxu0 0
  %1358 = vmatpush1.bf16.msra.mxu0 %v1333
  %1359 = vmatprep.subr.bf16.mxu0 0
  %1360 = vmatpush1.bf16.msra.mxu0 %v1332
  %1361 = vmatprep.subr.bf16.mxu0 0
  %1362 = vmatpush1.bf16.msra.mxu0 %v1331
  %1363 = vmatprep.subr.bf16.mxu0 0
  %1364 = vmatpush2.bf16.msra.mxu0 0
  %1365 = vmatprep.subr.bf16.mxu0 0
  %1366 = vmatpush2.bf16.msra.mxu0 0
  %1367 = vmatprep.subr.bf16.mxu0 0
  %1368 = vmatpush2.bf16.msra.mxu0 0
  %1369 = vmatprep.subr.bf16.mxu0 0
  %1370 = vmatpush2.bf16.msra.mxu0 0
  %1371 = vmatprep.subr.bf16.mxu0 0
  %1372 = vmatpush2.bf16.msra.mxu0 0
  %1373 = vmatprep.subr.bf16.mxu0 0
  %1374 = vmatpush2.bf16.msra.mxu0 0
  %1375 = vmatprep.subr.bf16.mxu0 0
  %1376 = vmatpush2.bf16.msra.mxu0 0
  %1377 = vmatprep.subr.bf16.mxu0 0
  %1378 = vmatpush2.bf16.msra.mxu0 0
  %1379 = vmatprep.mubr.bf16.mxu0 0
  %1380 = vmatmul.mubr.bf16.gmra.mxu0 %v1277
  %v1381 = vpop.f32.mrf.mxu0
  %v1382 = vadd.f32 %v1298, %v1381
  %v1383 = vpop.f32.mrf.mxu0
  %v1384 = vpop.f32.mrf.mxu0
  %v1385 = vpop.f32.mrf.mxu0
  %1386 = vdwg.mxu0
  %v1387 = vadd.f32 %v1190, %v1382
  %v1388 = vsel %vm129, %v1387, 0.0
  %1389 = vadd.xlane.f32.xlu0 %v1388
  %v1390 = vpop.xlane.xlu0 %1389
  %v1391 = vmul.f32 %v1390, %v177
  %v1392 = vsub.f32 %v1387, %v1391
  %v1393 = vmul.f32 %v1392, %v1392
  %v1394 = vsel %vm129, %v1393, 0.0
  %1395 = vadd.xlane.f32.xlu0 %v1394
  %v1396 = vpop.xlane.xlu0 %1395
  %v1397 = vmul.f32 %v1396, %v177
  %v1398 = vadd.f32 %v1397, 1e-05
  %v1399 = vrsqrt.pop %v1398
  %v1400 = vmul.f32 %v1392, %v1399
  %v1401 = vlaneseq
  %v1402 = vshrl.u32 %v1401, 7
  %v1403 = vsub.s32 0, %v1402
  %v1404 = vrot.slane %v1084, %v1403
  %v1405 = vmul.f32 %v1400, %v1404
  %v1406 = vlaneseq
  %v1407 = vshrl.u32 %v1406, 7
  %v1408 = vsub.s32 0, %v1407
  %v1409 = vrot.slane %v1085, %v1408
  %v1410 = vadd.f32 %v1405, %v1409
  %v1411 = vld [vmem:[%s30 + $0x1] sm:$0x1]
  %v1412 = vld [vmem:[%s30 + $0x2] sm:$0x1]
  %v1413 = vlaneseq
  %v1414 = vshrl.u32 %v1413, 7
  %v1415 = vsub.s32 0, %v1414
  %v1416 = vrot.slane %v1411, %v1415
  %v1417 = vmul.f32 %v1410, %v1416
  %v1418 = vsel %vm129, %v1417, 0.0
  %1419 = vadd.xlane.f32.xlu0 %v1418
  %v1420 = vpop.xlane.xlu0 %1419
  %v1421 = vlaneseq
  %v1422 = vshrl.u32 %v1421, 7
  %v1423 = vsub.s32 0, %v1422
  %v1424 = vrot.slane %v1412, %v1423
  %v1425 = vadd.f32 %v1420, %v1424
  %v1426 = vxor.u32 %v1425, 2147483648
  %v1427 = vmul.f32 %v1426, 1.442695
  %v1428 = vpow.pop %v1427
  %v1429 = vadd.f32 %v1428, 1.0
  %v1430 = vrcp.pop %v1429
  %v1431 = vmul.f32 1.0, %v1430
  %vm1432 = vcmask 7168
  %1433 = vst.msk [vmem:[%s7] sm:$0xff] %vm1432, %v1431
  // Predicated region
  $region30: #{tpu_custom_call.1} parent=0 // pred_check
    _
  $region31: #{tpu_custom_call.1} parent=0 // pred_check_branch
    %1435 = sbr.rel (0) target = $region33
  $region32: #{tpu_custom_call.1} parent=0 // pred_region
    _
  $region33: #{tpu_custom_call.1} parent=0 // pred_fallthru
    _
  // Predicated region
  $region34: #{tpu_custom_call.1} parent=0 // pred_check
    _
  $region35: #{tpu_custom_call.1} parent=0 // pred_check_branch
    %1437 = sbr.rel (0) target = $region37
  $region36: #{tpu_custom_call.1} parent=0 // pred_region
    _
  $region37: #{tpu_custom_call.1} parent=0 // pred_fallthru
    _

</llo_original>
